<compile_context>
chip_gen: v7x
topology: tpu7x:2x2x1
jax: 0.10.0
libtpu: 0.0.40
codegen_flags: <defaults>
</compile_context>

<pallas_src>
import functools
import math

import jax
import jax.numpy as jnp
from jax import lax
from jax.experimental import pallas as pl
from jax.experimental.pallas import tpu as pltpu

EPS = 1e-5       # nn.LayerNorm default
NEG_BIG = -1e30  # additive key-mask bias


def _layer_norm(x, gamma, beta):
    mu = jnp.mean(x, axis=-1, keepdims=True)
    var = jnp.mean((x - mu) ** 2, axis=-1, keepdims=True)
    return (x - mu) * lax.rsqrt(var + EPS) * gamma + beta


def _transformer_layer_kernel(x_ref, bias_ref, wqkv_ref, wout_ref,
                              g1_ref, b1_ref, g2_ref, b2_ref,
                              w1_ref, fb1_ref, w2_ref, fb2_ref,
                              out_ref, *, num_heads):
    """One grid step = one batch tile; the whole layer is computed in-step."""
    Bt, L, E = x_ref.shape
    hd = E // num_heads

    x = x_ref[...]                                   # (Bt, L, E) f32
    xf = x.reshape(Bt * L, E)                        # batch-flattened rows (M = Bt*L)

    # ---------------- LayerNorm1 (f32) ----------------
    xn = _layer_norm(xf, g1_ref[...], b1_ref[...])

    # ---------------- fused QKV projection (lane-dense, N = 3E) ----------------
    qkv = jnp.dot(xn.astype(jnp.bfloat16), wqkv_ref[...],
                  preferred_element_type=jnp.float32)           # (Bt*L, 3E) f32
    qkv_b = qkv.astype(jnp.bfloat16).reshape(Bt, L, 3 * E)

    bias = bias_ref[...]                                        # (Bt, 1, L) additive

    # ------------- per-head attention (static unroll; softmax in f32) -------------
    ctx_heads = []
    for h in range(num_heads):
        qh = qkv_b[:, :, h * hd:(h + 1) * hd]                   # (Bt, L, hd) bf16
        kh = qkv_b[:, :, E + h * hd:E + (h + 1) * hd]
        vh = qkv_b[:, :, 2 * E + h * hd:2 * E + (h + 1) * hd]
        s = jnp.einsum('bld,bmd->blm', qh, kh,
                       preferred_element_type=jnp.float32)      # (Bt, L, L) f32
        s = s + bias                                            # key mask
        m = jnp.max(s, axis=-1, keepdims=True)
        p = jnp.exp(s - m)
        p = p * pl.reciprocal(jnp.sum(p, axis=-1, keepdims=True), approx=True)
        ctx_heads.append(jnp.einsum('blm,bmd->bld', p.astype(jnp.bfloat16), vh,
                                    preferred_element_type=jnp.float32))

    # head-major concat -> single fused output projection (K = E, not hd)
    ctx = jnp.concatenate(ctx_heads, axis=-1)                   # (Bt, L, E) f32
    ctx = ctx.reshape(Bt * L, E).astype(jnp.bfloat16)
    attn = jnp.dot(ctx, wout_ref[...], preferred_element_type=jnp.float32)

    x1 = xf + attn                                              # residual 1 (f32)

    # ---------------- LayerNorm2 + FFN ----------------
    x2 = _layer_norm(x1, g2_ref[...], b2_ref[...])
    h1 = jnp.dot(x2.astype(jnp.bfloat16), w1_ref[...],
                 preferred_element_type=jnp.float32) + fb1_ref[...]
    h1 = jnp.maximum(h1, 0.0)
    h2 = jnp.dot(h1.astype(jnp.bfloat16), w2_ref[...],
                 preferred_element_type=jnp.float32) + fb2_ref[...]

    out = x1 + h2                                               # residual 2
    out_ref[...] = out.reshape(Bt, L, E).astype(out_ref.dtype)


def transformer_layer(x_lbe, mask_bl, params, num_heads, *,
                      batch_tile=None, out_dtype=jnp.float32):
    """x_lbe: (length, batch, embed) like PyTorch; mask_bl: (batch, length)."""
    L, B, E = x_lbe.shape
    H = num_heads
    hd = E // H
    Fd = params["w1"].shape[1]
    scaling = hd ** (-0.5)

    bt = B if batch_tile is None else batch_tile
    assert B % bt == 0, "batch must be divisible by batch_tile"

    x_ble = jnp.transpose(x_lbe, (1, 0, 2)).astype(jnp.float32)           # (B, L, E)
    # additive key-mask bias, (B, 1, L)
    bias = jnp.where(mask_bl > 0.5, NEG_BIG, 0.0).astype(jnp.float32)[:, None, :]

    # bf16 weights; fold 1/sqrt(hd) into the Q columns of the fused QKV weight.
    wqkv = params["wqkv"].astype(jnp.float32)
    wqkv = wqkv.at[:, :E].multiply(scaling).astype(jnp.bfloat16)          # (E, 3E)
    wout = params["wout"].astype(jnp.bfloat16)                            # (E, E)
    w1 = params["w1"].astype(jnp.bfloat16)                                # (E, Fd)
    w2 = params["w2"].astype(jnp.bfloat16)                                # (Fd, E)

    def const(shape):
        n = len(shape)
        return pl.BlockSpec(shape, lambda b, n=n: (0,) * n)

    kernel = functools.partial(_transformer_layer_kernel, num_heads=H)

    out_ble = pl.pallas_call(
        kernel,
        grid=(B // bt,),
        in_specs=[
            pl.BlockSpec((bt, L, E), lambda b: (b, 0, 0)),   # x (batch tile)
            pl.BlockSpec((bt, 1, L), lambda b: (b, 0, 0)),   # additive key mask
            const((E, 3 * E)),                               # fused Wqkv (Q scaled)
            const((E, E)),                                   # Wout
            const((1, E)), const((1, E)),                    # ln1 gamma / beta
            const((1, E)), const((1, E)),                    # ln2 gamma / beta
            const((E, Fd)), const((1, Fd)),                  # fc1 W^T, bias
            const((Fd, E)), const((1, E)),                   # fc2 W^T, bias
        ],
        out_specs=pl.BlockSpec((bt, L, E), lambda b: (b, 0, 0)),
        out_shape=jax.ShapeDtypeStruct((B, L, E), out_dtype),
        compiler_params=pltpu.CompilerParams(
            dimension_semantics=("parallel",),
        ),
    )(x_ble, bias, wqkv, wout,
      params["g1"], params["b1"], params["g2"], params["b2"],
      w1, params["fb1"], w2, params["fb2"])

    return jnp.transpose(out_ble, (1, 0, 2))


# ---------------- pure-JAX f32 reference (mirrors the PyTorch forward) ----------------
def reference(x_lbe, mask_bl, params, num_heads):
    L, B, E = x_lbe.shape
    hd = E // num_heads

    def ln(x, g, b):
        mu = jnp.mean(x, axis=-1, keepdims=True)
        var = jnp.mean((x - mu) ** 2, axis=-1, keepdims=True)
        return (x - mu) * lax.rsqrt(var + EPS) * g + b

    resid = x_lbe
    x = ln(x_lbe, params["g1"][0], params["b1"][0])
    qkv = x @ params["wqkv"]
    q, k, v = jnp.split(qkv, 3, axis=-1)
    q = q * hd ** (-0.5)
    q = q.reshape(L, B * num_heads, hd).transpose(1, 0, 2)
    k = k.reshape(L, B * num_heads, hd).transpose(1, 0, 2)
    v = v.reshape(L, B * num_heads, hd).transpose(1, 0, 2)
    s = jnp.einsum('nld,nmd->nlm', q, k).reshape(B, num_heads, L, L)
    s = jnp.where(mask_bl[:, None, None, :] > 0.5, -jnp.inf, s)
    p = jax.nn.softmax(s.reshape(B * num_heads, L, L), axis=-1)
    attn = jnp.einsum('nlm,nmd->nld', p, v)
    attn = attn.transpose(1, 0, 2).reshape(L, B, E) @ params["wout"]
    x = resid + attn
    resid = x
    x = ln(x, params["g2"][0], params["b2"][0])
    h = jnp.maximum(x @ params["w1"] + params["fb1"][0], 0.0)
    h = h @ params["w2"] + params["fb2"][0]
    return resid + h


def init_params(key, embed_dim, ffn_dim):
    E, Fd = embed_dim, ffn_dim
    ks = jax.random.split(key, 6)

    def xavier(k, fan_in, fan_out, shape, gain=1.0):
        bound = gain * math.sqrt(6.0 / (fan_in + fan_out))
        return jax.random.uniform(k, shape, jnp.float32, -bound, bound)

    return {
        # nn.Linear stores (out, in); we pass the transpose so the kernel does x @ W
        "wqkv": xavier(ks[0], E, 3 * E, (E, 3 * E), gain=math.sqrt(2.0)),
        "wout": xavier(ks[1], E, E, (E, E)),
        "g1": jnp.ones((1, E), jnp.float32),
        "b1": jnp.zeros((1, E), jnp.float32),
        "g2": jnp.ones((1, E), jnp.float32),
        "b2": jnp.zeros((1, E), jnp.float32),
        "w1": xavier(ks[2], E, Fd, (E, Fd)),
        "fb1": 0.01 * jax.random.normal(ks[3], (1, Fd), jnp.float32),
        "w2": xavier(ks[4], Fd, E, (Fd, E)),
        "fb2": 0.01 * jax.random.normal(ks[5], (1, E), jnp.float32),
    }


if __name__ == "__main__":
    # Small shapes consistent with the module: seq=8, batch=2, embed=32, heads=4, ffn=64.
    L, B, E, H, Fd = 8, 2, 32, 4, 64
    key = jax.random.PRNGKey(0)
    kx, kp = jax.random.split(key)

    x = jax.random.normal(kx, (L, B, E), jnp.float32)          # (length, batch, embed)
    lengths = jnp.array([8, 6])
    mask = (jnp.arange(L)[None, :] >= lengths[:, None]).astype(jnp.float32)  # (B, L)

    params = init_params(kp, E, Fd)

    out = transformer_layer(x, mask, params, num_heads=H)
    out = jax.block_until_ready(out)

    ref = reference(x, mask, params, num_heads=H)
    assert out.shape == (L, B, E)
    # bf16 matmul operands (f32 accumulation) + approx reciprocal vs pure-f32 reference.
    assert jnp.allclose(out, ref, atol=5e-2, rtol=5e-2), \
        f"max abs diff {float(jnp.max(jnp.abs(out - ref)))}"

    print("KERNEL_OK")
</pallas_src>

<mosaic_0001>
module attributes {stable_mosaic.version = 11 : i64} {
  func.func @_transformer_layer_kernel(%arg0: i32, %arg1: memref<2x8x32xf32, #tpu.memory_space<vmem>>, %arg2: memref<2x1x8xf32, #tpu.memory_space<vmem>>, %arg3: memref<32x96xbf16, #tpu.memory_space<vmem>>, %arg4: memref<32x32xbf16, #tpu.memory_space<vmem>>, %arg5: memref<1x32xf32, #tpu.memory_space<vmem>>, %arg6: memref<1x32xf32, #tpu.memory_space<vmem>>, %arg7: memref<1x32xf32, #tpu.memory_space<vmem>>, %arg8: memref<1x32xf32, #tpu.memory_space<vmem>>, %arg9: memref<32x64xbf16, #tpu.memory_space<vmem>>, %arg10: memref<1x64xf32, #tpu.memory_space<vmem>>, %arg11: memref<64x32xbf16, #tpu.memory_space<vmem>>, %arg12: memref<1x32xf32, #tpu.memory_space<vmem>>, %arg13: memref<2x8x32xf32, #tpu.memory_space<vmem>>) attributes {dimension_semantics = [#tpu.dimension_semantics<parallel>], iteration_bounds = array<i64: 1>, scalar_prefetch = 0 : i64, scratch_operands = 0 : i64, tpu.core_type = #tpu.core_type<tc>, window_params = [{transform_indices = @transform_0, window_bounds = array<i64: 2, 8, 32>}, {transform_indices = @transform_1, window_bounds = array<i64: 2, 1, 8>}, {pipeline_mode = #tpu.pipeline_mode<synchronous>, transform_indices = @transform_2, window_bounds = array<i64: 32, 96>}, {pipeline_mode = #tpu.pipeline_mode<synchronous>, transform_indices = @transform_3, window_bounds = array<i64: 32, 32>}, {pipeline_mode = #tpu.pipeline_mode<synchronous>, transform_indices = @transform_4, window_bounds = array<i64: 1, 32>}, {pipeline_mode = #tpu.pipeline_mode<synchronous>, transform_indices = @transform_5, window_bounds = array<i64: 1, 32>}, {pipeline_mode = #tpu.pipeline_mode<synchronous>, transform_indices = @transform_6, window_bounds = array<i64: 1, 32>}, {pipeline_mode = #tpu.pipeline_mode<synchronous>, transform_indices = @transform_7, window_bounds = array<i64: 1, 32>}, {pipeline_mode = #tpu.pipeline_mode<synchronous>, transform_indices = @transform_8, window_bounds = array<i64: 32, 64>}, {pipeline_mode = #tpu.pipeline_mode<synchronous>, transform_indices = @transform_9, window_bounds = array<i64: 1, 64>}, {pipeline_mode = #tpu.pipeline_mode<synchronous>, transform_indices = @transform_10, window_bounds = array<i64: 64, 32>}, {pipeline_mode = #tpu.pipeline_mode<synchronous>, transform_indices = @transform_11, window_bounds = array<i64: 1, 32>}, {transform_indices = @transform_12, window_bounds = array<i64: 2, 8, 32>}]} {
    %c0 = arith.constant 0 : index
    %c0_0 = arith.constant 0 : index
    %c0_1 = arith.constant 0 : index
    %0 = vector.load %arg1[%c0, %c0_0, %c0_1] : memref<2x8x32xf32, #tpu.memory_space<vmem>>, vector<2x8x32xf32>
    %1 = vector.shape_cast %0 : vector<2x8x32xf32> to vector<16x32xf32>
    %c0_2 = arith.constant 0 : index
    %c0_3 = arith.constant 0 : index
    %2 = vector.load %arg5[%c0_2, %c0_3] : memref<1x32xf32, #tpu.memory_space<vmem>>, vector<1x32xf32>
    %c0_4 = arith.constant 0 : index
    %c0_5 = arith.constant 0 : index
    %3 = vector.load %arg6[%c0_4, %c0_5] : memref<1x32xf32, #tpu.memory_space<vmem>>, vector<1x32xf32>
    %cst = arith.constant dense<0.000000e+00> : vector<16xf32>
    %4 = vector.multi_reduction <add>, %1, %cst [1] : vector<16x32xf32> to vector<16xf32>
    %5 = vector.shape_cast %4 : vector<16xf32> to vector<16x1xf32>
    %cst_6 = arith.constant 3.200000e+01 : f32
    %6 = vector.broadcast %cst_6 : f32 to vector<16x1xf32>
    %7 = arith.divf %5, %6 : vector<16x1xf32>
    %8 = vector.broadcast %7 : vector<16x1xf32> to vector<16x32xf32>
    %9 = arith.subf %1, %8 : vector<16x32xf32>
    %10 = arith.mulf %9, %9 : vector<16x32xf32>
    %cst_7 = arith.constant dense<0.000000e+00> : vector<16xf32>
    %11 = vector.multi_reduction <add>, %10, %cst_7 [1] : vector<16x32xf32> to vector<16xf32>
    %12 = vector.shape_cast %11 : vector<16xf32> to vector<16x1xf32>
    %cst_8 = arith.constant 3.200000e+01 : f32
    %13 = vector.broadcast %cst_8 : f32 to vector<16x1xf32>
    %14 = arith.divf %12, %13 : vector<16x1xf32>
    %15 = vector.broadcast %7 : vector<16x1xf32> to vector<16x32xf32>
    %16 = arith.subf %1, %15 : vector<16x32xf32>
    %cst_9 = arith.constant 9.99999974E-6 : f32
    %17 = vector.broadcast %cst_9 : f32 to vector<16x1xf32>
    %18 = arith.addf %14, %17 : vector<16x1xf32>
    %19 = math.rsqrt %18 : vector<16x1xf32>
    %20 = vector.broadcast %19 : vector<16x1xf32> to vector<16x32xf32>
    %21 = arith.mulf %16, %20 : vector<16x32xf32>
    %22 = vector.broadcast %2 : vector<1x32xf32> to vector<16x32xf32>
    %23 = arith.mulf %21, %22 : vector<16x32xf32>
    %24 = vector.broadcast %3 : vector<1x32xf32> to vector<16x32xf32>
    %25 = arith.addf %23, %24 : vector<16x32xf32>
    %26 = arith.truncf %25 : vector<16x32xf32> to vector<16x32xbf16>
    %c0_10 = arith.constant 0 : index
    %c0_11 = arith.constant 0 : index
    %27 = vector.load %arg3[%c0_10, %c0_11] : memref<32x96xbf16, #tpu.memory_space<vmem>>, vector<32x96xbf16>
    %cst_12 = arith.constant dense<0.000000e+00> : vector<16x96xf32>
    %28 = tpu.matmul %26, %27, %cst_12 {dimension_numbers = #tpu.dot_dimension_numbers<[1], [0], [0], [1], [0, 0, 1, 1], [], []>} : vector<16x32xbf16>, vector<32x96xbf16>, vector<16x96xf32> -> vector<16x96xf32>
    %29 = arith.truncf %28 : vector<16x96xf32> to vector<16x96xbf16>
    %30 = vector.shape_cast %29 : vector<16x96xbf16> to vector<2x8x96xbf16>
    %c0_13 = arith.constant 0 : index
    %c0_14 = arith.constant 0 : index
    %c0_15 = arith.constant 0 : index
    %31 = vector.load %arg2[%c0_13, %c0_14, %c0_15] : memref<2x1x8xf32, #tpu.memory_space<vmem>>, vector<2x1x8xf32>
    %32 = vector.extract_strided_slice %30 {offsets = [0, 0, 0], sizes = [2, 8, 8], strides = [1, 1, 1]} : vector<2x8x96xbf16> to vector<2x8x8xbf16>
    %33 = vector.extract_strided_slice %30 {offsets = [0, 0, 32], sizes = [2, 8, 8], strides = [1, 1, 1]} : vector<2x8x96xbf16> to vector<2x8x8xbf16>
    %34 = vector.extract_strided_slice %30 {offsets = [0, 0, 64], sizes = [2, 8, 8], strides = [1, 1, 1]} : vector<2x8x96xbf16> to vector<2x8x8xbf16>
    "tpu.trace_start"() <{level = 10 : i32, message = "bld,bmd->blm"}> : () -> ()
    %cst_16 = arith.constant dense<0.000000e+00> : vector<2x8x8xf32>
    %35 = tpu.matmul %32, %33, %cst_16 {dimension_numbers = #tpu.dot_dimension_numbers<[2], [2], [1], [1], [0, 0, 0, 1, 1, 1], [0], [0]>} : vector<2x8x8xbf16>, vector<2x8x8xbf16>, vector<2x8x8xf32> -> vector<2x8x8xf32>
    "tpu.trace_stop"() : () -> ()
    %36 = vector.broadcast %31 : vector<2x1x8xf32> to vector<2x8x8xf32>
    %37 = arith.addf %35, %36 : vector<2x8x8xf32>
    %cst_17 = arith.constant dense<0xFF800000> : vector<2x8xf32>
    %38 = vector.multi_reduction <maximumf>, %37, %cst_17 [2] : vector<2x8x8xf32> to vector<2x8xf32>
    %39 = vector.shape_cast %38 : vector<2x8xf32> to vector<2x8x1xf32>
    %40 = vector.broadcast %39 : vector<2x8x1xf32> to vector<2x8x8xf32>
    %41 = arith.subf %37, %40 : vector<2x8x8xf32>
    %42 = math.exp %41 : vector<2x8x8xf32>
    %cst_18 = arith.constant dense<0.000000e+00> : vector<2x8xf32>
    %43 = vector.multi_reduction <add>, %42, %cst_18 [2] : vector<2x8x8xf32> to vector<2x8xf32>
    %44 = vector.shape_cast %43 : vector<2x8xf32> to vector<2x8x1xf32>
    %45 = tpu.reciprocal %44 {approx = true} : vector<2x8x1xf32> -> vector<2x8x1xf32>
    %46 = vector.broadcast %45 : vector<2x8x1xf32> to vector<2x8x8xf32>
    %47 = arith.mulf %42, %46 : vector<2x8x8xf32>
    %48 = arith.truncf %47 : vector<2x8x8xf32> to vector<2x8x8xbf16>
    "tpu.trace_start"() <{level = 10 : i32, message = "blm,bmd->bld"}> : () -> ()
    %cst_19 = arith.constant dense<0.000000e+00> : vector<2x8x8xf32>
    %49 = tpu.matmul %48, %34, %cst_19 {dimension_numbers = #tpu.dot_dimension_numbers<[2], [1], [1], [2], [0, 0, 0, 1, 1, 2], [0], [0]>} : vector<2x8x8xbf16>, vector<2x8x8xbf16>, vector<2x8x8xf32> -> vector<2x8x8xf32>
    "tpu.trace_stop"() : () -> ()
    %50 = vector.extract_strided_slice %30 {offsets = [0, 0, 8], sizes = [2, 8, 8], strides = [1, 1, 1]} : vector<2x8x96xbf16> to vector<2x8x8xbf16>
    %51 = vector.extract_strided_slice %30 {offsets = [0, 0, 40], sizes = [2, 8, 8], strides = [1, 1, 1]} : vector<2x8x96xbf16> to vector<2x8x8xbf16>
    %52 = vector.extract_strided_slice %30 {offsets = [0, 0, 72], sizes = [2, 8, 8], strides = [1, 1, 1]} : vector<2x8x96xbf16> to vector<2x8x8xbf16>
    "tpu.trace_start"() <{level = 10 : i32, message = "bld,bmd->blm"}> : () -> ()
    %cst_20 = arith.constant dense<0.000000e+00> : vector<2x8x8xf32>
    %53 = tpu.matmul %50, %51, %cst_20 {dimension_numbers = #tpu.dot_dimension_numbers<[2], [2], [1], [1], [0, 0, 0, 1, 1, 1], [0], [0]>} : vector<2x8x8xbf16>, vector<2x8x8xbf16>, vector<2x8x8xf32> -> vector<2x8x8xf32>
    "tpu.trace_stop"() : () -> ()
    %54 = vector.broadcast %31 : vector<2x1x8xf32> to vector<2x8x8xf32>
    %55 = arith.addf %53, %54 : vector<2x8x8xf32>
    %cst_21 = arith.constant dense<0xFF800000> : vector<2x8xf32>
    %56 = vector.multi_reduction <maximumf>, %55, %cst_21 [2] : vector<2x8x8xf32> to vector<2x8xf32>
    %57 = vector.shape_cast %56 : vector<2x8xf32> to vector<2x8x1xf32>
    %58 = vector.broadcast %57 : vector<2x8x1xf32> to vector<2x8x8xf32>
    %59 = arith.subf %55, %58 : vector<2x8x8xf32>
    %60 = math.exp %59 : vector<2x8x8xf32>
    %cst_22 = arith.constant dense<0.000000e+00> : vector<2x8xf32>
    %61 = vector.multi_reduction <add>, %60, %cst_22 [2] : vector<2x8x8xf32> to vector<2x8xf32>
    %62 = vector.shape_cast %61 : vector<2x8xf32> to vector<2x8x1xf32>
    %63 = tpu.reciprocal %62 {approx = true} : vector<2x8x1xf32> -> vector<2x8x1xf32>
    %64 = vector.broadcast %63 : vector<2x8x1xf32> to vector<2x8x8xf32>
    %65 = arith.mulf %60, %64 : vector<2x8x8xf32>
    %66 = arith.truncf %65 : vector<2x8x8xf32> to vector<2x8x8xbf16>
    "tpu.trace_start"() <{level = 10 : i32, message = "blm,bmd->bld"}> : () -> ()
    %cst_23 = arith.constant dense<0.000000e+00> : vector<2x8x8xf32>
    %67 = tpu.matmul %66, %52, %cst_23 {dimension_numbers = #tpu.dot_dimension_numbers<[2], [1], [1], [2], [0, 0, 0, 1, 1, 2], [0], [0]>} : vector<2x8x8xbf16>, vector<2x8x8xbf16>, vector<2x8x8xf32> -> vector<2x8x8xf32>
    "tpu.trace_stop"() : () -> ()
    %68 = vector.extract_strided_slice %30 {offsets = [0, 0, 16], sizes = [2, 8, 8], strides = [1, 1, 1]} : vector<2x8x96xbf16> to vector<2x8x8xbf16>
    %69 = vector.extract_strided_slice %30 {offsets = [0, 0, 48], sizes = [2, 8, 8], strides = [1, 1, 1]} : vector<2x8x96xbf16> to vector<2x8x8xbf16>
    %70 = vector.extract_strided_slice %30 {offsets = [0, 0, 80], sizes = [2, 8, 8], strides = [1, 1, 1]} : vector<2x8x96xbf16> to vector<2x8x8xbf16>
    "tpu.trace_start"() <{level = 10 : i32, message = "bld,bmd->blm"}> : () -> ()
    %cst_24 = arith.constant dense<0.000000e+00> : vector<2x8x8xf32>
    %71 = tpu.matmul %68, %69, %cst_24 {dimension_numbers = #tpu.dot_dimension_numbers<[2], [2], [1], [1], [0, 0, 0, 1, 1, 1], [0], [0]>} : vector<2x8x8xbf16>, vector<2x8x8xbf16>, vector<2x8x8xf32> -> vector<2x8x8xf32>
    "tpu.trace_stop"() : () -> ()
    %72 = vector.broadcast %31 : vector<2x1x8xf32> to vector<2x8x8xf32>
    %73 = arith.addf %71, %72 : vector<2x8x8xf32>
    %cst_25 = arith.constant dense<0xFF800000> : vector<2x8xf32>
    %74 = vector.multi_reduction <maximumf>, %73, %cst_25 [2] : vector<2x8x8xf32> to vector<2x8xf32>
    %75 = vector.shape_cast %74 : vector<2x8xf32> to vector<2x8x1xf32>
    %76 = vector.broadcast %75 : vector<2x8x1xf32> to vector<2x8x8xf32>
    %77 = arith.subf %73, %76 : vector<2x8x8xf32>
    %78 = math.exp %77 : vector<2x8x8xf32>
    %cst_26 = arith.constant dense<0.000000e+00> : vector<2x8xf32>
    %79 = vector.multi_reduction <add>, %78, %cst_26 [2] : vector<2x8x8xf32> to vector<2x8xf32>
    %80 = vector.shape_cast %79 : vector<2x8xf32> to vector<2x8x1xf32>
    %81 = tpu.reciprocal %80 {approx = true} : vector<2x8x1xf32> -> vector<2x8x1xf32>
    %82 = vector.broadcast %81 : vector<2x8x1xf32> to vector<2x8x8xf32>
    %83 = arith.mulf %78, %82 : vector<2x8x8xf32>
    %84 = arith.truncf %83 : vector<2x8x8xf32> to vector<2x8x8xbf16>
    "tpu.trace_start"() <{level = 10 : i32, message = "blm,bmd->bld"}> : () -> ()
    %cst_27 = arith.constant dense<0.000000e+00> : vector<2x8x8xf32>
    %85 = tpu.matmul %84, %70, %cst_27 {dimension_numbers = #tpu.dot_dimension_numbers<[2], [1], [1], [2], [0, 0, 0, 1, 1, 2], [0], [0]>} : vector<2x8x8xbf16>, vector<2x8x8xbf16>, vector<2x8x8xf32> -> vector<2x8x8xf32>
    "tpu.trace_stop"() : () -> ()
    %86 = vector.extract_strided_slice %30 {offsets = [0, 0, 24], sizes = [2, 8, 8], strides = [1, 1, 1]} : vector<2x8x96xbf16> to vector<2x8x8xbf16>
    %87 = vector.extract_strided_slice %30 {offsets = [0, 0, 56], sizes = [2, 8, 8], strides = [1, 1, 1]} : vector<2x8x96xbf16> to vector<2x8x8xbf16>
    %88 = vector.extract_strided_slice %30 {offsets = [0, 0, 88], sizes = [2, 8, 8], strides = [1, 1, 1]} : vector<2x8x96xbf16> to vector<2x8x8xbf16>
    "tpu.trace_start"() <{level = 10 : i32, message = "bld,bmd->blm"}> : () -> ()
    %cst_28 = arith.constant dense<0.000000e+00> : vector<2x8x8xf32>
    %89 = tpu.matmul %86, %87, %cst_28 {dimension_numbers = #tpu.dot_dimension_numbers<[2], [2], [1], [1], [0, 0, 0, 1, 1, 1], [0], [0]>} : vector<2x8x8xbf16>, vector<2x8x8xbf16>, vector<2x8x8xf32> -> vector<2x8x8xf32>
    "tpu.trace_stop"() : () -> ()
    %90 = vector.broadcast %31 : vector<2x1x8xf32> to vector<2x8x8xf32>
    %91 = arith.addf %89, %90 : vector<2x8x8xf32>
    %cst_29 = arith.constant dense<0xFF800000> : vector<2x8xf32>
    %92 = vector.multi_reduction <maximumf>, %91, %cst_29 [2] : vector<2x8x8xf32> to vector<2x8xf32>
    %93 = vector.shape_cast %92 : vector<2x8xf32> to vector<2x8x1xf32>
    %94 = vector.broadcast %93 : vector<2x8x1xf32> to vector<2x8x8xf32>
    %95 = arith.subf %91, %94 : vector<2x8x8xf32>
    %96 = math.exp %95 : vector<2x8x8xf32>
    %cst_30 = arith.constant dense<0.000000e+00> : vector<2x8xf32>
    %97 = vector.multi_reduction <add>, %96, %cst_30 [2] : vector<2x8x8xf32> to vector<2x8xf32>
    %98 = vector.shape_cast %97 : vector<2x8xf32> to vector<2x8x1xf32>
    %99 = tpu.reciprocal %98 {approx = true} : vector<2x8x1xf32> -> vector<2x8x1xf32>
    %100 = vector.broadcast %99 : vector<2x8x1xf32> to vector<2x8x8xf32>
    %101 = arith.mulf %96, %100 : vector<2x8x8xf32>
    %102 = arith.truncf %101 : vector<2x8x8xf32> to vector<2x8x8xbf16>
    "tpu.trace_start"() <{level = 10 : i32, message = "blm,bmd->bld"}> : () -> ()
    %cst_31 = arith.constant dense<0.000000e+00> : vector<2x8x8xf32>
    %103 = tpu.matmul %102, %88, %cst_31 {dimension_numbers = #tpu.dot_dimension_numbers<[2], [1], [1], [2], [0, 0, 0, 1, 1, 2], [0], [0]>} : vector<2x8x8xbf16>, vector<2x8x8xbf16>, vector<2x8x8xf32> -> vector<2x8x8xf32>
    "tpu.trace_stop"() : () -> ()
    %104 = tpu.concatenate %49, %67, %85, %103 in 2 : vector<2x8x8xf32>, vector<2x8x8xf32>, vector<2x8x8xf32>, vector<2x8x8xf32> -> vector<2x8x32xf32>
    %105 = vector.shape_cast %104 : vector<2x8x32xf32> to vector<16x32xf32>
    %106 = arith.truncf %105 : vector<16x32xf32> to vector<16x32xbf16>
    %c0_32 = arith.constant 0 : index
    %c0_33 = arith.constant 0 : index
    %107 = vector.load %arg4[%c0_32, %c0_33] : memref<32x32xbf16, #tpu.memory_space<vmem>>, vector<32x32xbf16>
    %cst_34 = arith.constant dense<0.000000e+00> : vector<16x32xf32>
    %108 = tpu.matmul %106, %107, %cst_34 {dimension_numbers = #tpu.dot_dimension_numbers<[1], [0], [0], [1], [0, 0, 1, 1], [], []>} : vector<16x32xbf16>, vector<32x32xbf16>, vector<16x32xf32> -> vector<16x32xf32>
    %109 = arith.addf %1, %108 : vector<16x32xf32>
    %c0_35 = arith.constant 0 : index
    %c0_36 = arith.constant 0 : index
    %110 = vector.load %arg7[%c0_35, %c0_36] : memref<1x32xf32, #tpu.memory_space<vmem>>, vector<1x32xf32>
    %c0_37 = arith.constant 0 : index
    %c0_38 = arith.constant 0 : index
    %111 = vector.load %arg8[%c0_37, %c0_38] : memref<1x32xf32, #tpu.memory_space<vmem>>, vector<1x32xf32>
    %cst_39 = arith.constant dense<0.000000e+00> : vector<16xf32>
    %112 = vector.multi_reduction <add>, %109, %cst_39 [1] : vector<16x32xf32> to vector<16xf32>
    %113 = vector.shape_cast %112 : vector<16xf32> to vector<16x1xf32>
    %cst_40 = arith.constant 3.200000e+01 : f32
    %114 = vector.broadcast %cst_40 : f32 to vector<16x1xf32>
    %115 = arith.divf %113, %114 : vector<16x1xf32>
    %116 = vector.broadcast %115 : vector<16x1xf32> to vector<16x32xf32>
    %117 = arith.subf %109, %116 : vector<16x32xf32>
    %118 = arith.mulf %117, %117 : vector<16x32xf32>
    %cst_41 = arith.constant dense<0.000000e+00> : vector<16xf32>
    %119 = vector.multi_reduction <add>, %118, %cst_41 [1] : vector<16x32xf32> to vector<16xf32>
    %120 = vector.shape_cast %119 : vector<16xf32> to vector<16x1xf32>
    %cst_42 = arith.constant 3.200000e+01 : f32
    %121 = vector.broadcast %cst_42 : f32 to vector<16x1xf32>
    %122 = arith.divf %120, %121 : vector<16x1xf32>
    %123 = vector.broadcast %115 : vector<16x1xf32> to vector<16x32xf32>
    %124 = arith.subf %109, %123 : vector<16x32xf32>
    %cst_43 = arith.constant 9.99999974E-6 : f32
    %125 = vector.broadcast %cst_43 : f32 to vector<16x1xf32>
    %126 = arith.addf %122, %125 : vector<16x1xf32>
    %127 = math.rsqrt %126 : vector<16x1xf32>
    %128 = vector.broadcast %127 : vector<16x1xf32> to vector<16x32xf32>
    %129 = arith.mulf %124, %128 : vector<16x32xf32>
    %130 = vector.broadcast %110 : vector<1x32xf32> to vector<16x32xf32>
    %131 = arith.mulf %129, %130 : vector<16x32xf32>
    %132 = vector.broadcast %111 : vector<1x32xf32> to vector<16x32xf32>
    %133 = arith.addf %131, %132 : vector<16x32xf32>
    %134 = arith.truncf %133 : vector<16x32xf32> to vector<16x32xbf16>
    %c0_44 = arith.constant 0 : index
    %c0_45 = arith.constant 0 : index
    %135 = vector.load %arg9[%c0_44, %c0_45] : memref<32x64xbf16, #tpu.memory_space<vmem>>, vector<32x64xbf16>
    %cst_46 = arith.constant dense<0.000000e+00> : vector<16x64xf32>
    %136 = tpu.matmul %134, %135, %cst_46 {dimension_numbers = #tpu.dot_dimension_numbers<[1], [0], [0], [1], [0, 0, 1, 1], [], []>} : vector<16x32xbf16>, vector<32x64xbf16>, vector<16x64xf32> -> vector<16x64xf32>
    %c0_47 = arith.constant 0 : index
    %c0_48 = arith.constant 0 : index
    %137 = vector.load %arg10[%c0_47, %c0_48] : memref<1x64xf32, #tpu.memory_space<vmem>>, vector<1x64xf32>
    %138 = vector.broadcast %137 : vector<1x64xf32> to vector<16x64xf32>
    %139 = arith.addf %136, %138 : vector<16x64xf32>
    %cst_49 = arith.constant 0.000000e+00 : f32
    %140 = vector.broadcast %cst_49 : f32 to vector<16x64xf32>
    %141 = arith.maximumf %139, %140 : vector<16x64xf32>
    %142 = arith.truncf %141 : vector<16x64xf32> to vector<16x64xbf16>
    %c0_50 = arith.constant 0 : index
    %c0_51 = arith.constant 0 : index
    %143 = vector.load %arg11[%c0_50, %c0_51] : memref<64x32xbf16, #tpu.memory_space<vmem>>, vector<64x32xbf16>
    %cst_52 = arith.constant dense<0.000000e+00> : vector<16x32xf32>
    %144 = tpu.matmul %142, %143, %cst_52 {dimension_numbers = #tpu.dot_dimension_numbers<[1], [0], [0], [1], [0, 0, 1, 1], [], []>} : vector<16x64xbf16>, vector<64x32xbf16>, vector<16x32xf32> -> vector<16x32xf32>
    %c0_53 = arith.constant 0 : index
    %c0_54 = arith.constant 0 : index
    %145 = vector.load %arg12[%c0_53, %c0_54] : memref<1x32xf32, #tpu.memory_space<vmem>>, vector<1x32xf32>
    %146 = vector.broadcast %145 : vector<1x32xf32> to vector<16x32xf32>
    %147 = arith.addf %144, %146 : vector<16x32xf32>
    %148 = arith.addf %109, %147 : vector<16x32xf32>
    %149 = vector.shape_cast %148 : vector<16x32xf32> to vector<2x8x32xf32>
    %c0_55 = arith.constant 0 : index
    %c0_56 = arith.constant 0 : index
    %c0_57 = arith.constant 0 : index
    %150 = vector.load %arg13[%c0_55, %c0_56, %c0_57] : memref<2x8x32xf32, #tpu.memory_space<vmem>>, vector<2x8x32xf32>
    tpu.vector_store %arg13[%c0_55, %c0_56, %c0_57], %149 {strides = array<i32>} : memref<2x8x32xf32, #tpu.memory_space<vmem>>, vector<2x8x32xf32>,
    return
  }
  func.func @transform_0(%arg0: i32) -> (i32, i32, i32) {
    %c0_i32 = arith.constant 0 : i32
    %c0_i32_0 = arith.constant 0 : i32
    %c0_i32_1 = arith.constant 0 : i32
    return %arg0, %c0_i32, %c0_i32_0 : i32, i32, i32
  }
  func.func @transform_1(%arg0: i32) -> (i32, i32, i32) {
    %c0_i32 = arith.constant 0 : i32
    %c0_i32_0 = arith.constant 0 : i32
    %c0_i32_1 = arith.constant 0 : i32
    return %arg0, %c0_i32, %c0_i32_0 : i32, i32, i32
  }
  func.func @transform_2(%arg0: i32) -> (i32, i32) {
    %c0_i32 = arith.constant 0 : i32
    %c0_i32_0 = arith.constant 0 : i32
    %c0_i32_1 = arith.constant 0 : i32
    return %c0_i32, %c0_i32_0 : i32, i32
  }
  func.func @transform_3(%arg0: i32) -> (i32, i32) {
    %c0_i32 = arith.constant 0 : i32
    %c0_i32_0 = arith.constant 0 : i32
    %c0_i32_1 = arith.constant 0 : i32
    return %c0_i32, %c0_i32_0 : i32, i32
  }
  func.func @transform_4(%arg0: i32) -> (i32, i32) {
    %c0_i32 = arith.constant 0 : i32
    %c0_i32_0 = arith.constant 0 : i32
    %c0_i32_1 = arith.constant 0 : i32
    return %c0_i32, %c0_i32_0 : i32, i32
  }
  func.func @transform_5(%arg0: i32) -> (i32, i32) {
    %c0_i32 = arith.constant 0 : i32
    %c0_i32_0 = arith.constant 0 : i32
    %c0_i32_1 = arith.constant 0 : i32
    return %c0_i32, %c0_i32_0 : i32, i32
  }
  func.func @transform_6(%arg0: i32) -> (i32, i32) {
    %c0_i32 = arith.constant 0 : i32
    %c0_i32_0 = arith.constant 0 : i32
    %c0_i32_1 = arith.constant 0 : i32
    return %c0_i32, %c0_i32_0 : i32, i32
  }
  func.func @transform_7(%arg0: i32) -> (i32, i32) {
    %c0_i32 = arith.constant 0 : i32
    %c0_i32_0 = arith.constant 0 : i32
    %c0_i32_1 = arith.constant 0 : i32
    return %c0_i32, %c0_i32_0 : i32, i32
  }
  func.func @transform_8(%arg0: i32) -> (i32, i32) {
    %c0_i32 = arith.constant 0 : i32
    %c0_i32_0 = arith.constant 0 : i32
    %c0_i32_1 = arith.constant 0 : i32
    return %c0_i32, %c0_i32_0 : i32, i32
  }
  func.func @transform_9(%arg0: i32) -> (i32, i32) {
    %c0_i32 = arith.constant 0 : i32
    %c0_i32_0 = arith.constant 0 : i32
    %c0_i32_1 = arith.constant 0 : i32
    return %c0_i32, %c0_i32_0 : i32, i32
  }
  func.func @transform_10(%arg0: i32) -> (i32, i32) {
    %c0_i32 = arith.constant 0 : i32
    %c0_i32_0 = arith.constant 0 : i32
    %c0_i32_1 = arith.constant 0 : i32
    return %c0_i32, %c0_i32_0 : i32, i32
  }
  func.func @transform_11(%arg0: i32) -> (i32, i32) {
    %c0_i32 = arith.constant 0 : i32
    %c0_i32_0 = arith.constant 0 : i32
    %c0_i32_1 = arith.constant 0 : i32
    return %c0_i32, %c0_i32_0 : i32, i32
  }
  func.func @transform_12(%arg0: i32) -> (i32, i32, i32) {
    %c0_i32 = arith.constant 0 : i32
    %c0_i32_0 = arith.constant 0 : i32
    %c0_i32_1 = arith.constant 0 : i32
    return %arg0, %c0_i32, %c0_i32_0 : i32, i32, i32
  }
}

</mosaic_0001>

<llo_original>
// kernel: tpu_custom_call.1
$region0: #{tpu_custom_call.1}
  #allocation0 [shape = 'u32[]', space=smem, size = 0x4, offset = 0x4, fixed_abs, tag = 'smem constant byte address 0x4 - core index']
  #allocation1 [shape = 'u32[144,128]{1,0:T(1,128)}', space=vmem, size = 0x12000, scoped, tag = 'internal scratch']
  %s0 = inlined_call_operand.vmem [shape: f32[2,8,32], index: 0, kind: input, shape index: {}]
  %s1 = inlined_call_operand.vmem [shape: f32[2,1,8], index: 1, kind: input, shape index: {}]
  %s2 = inlined_call_operand.vmem [shape: bf16[32,96], index: 2, kind: input, shape index: {}]
  %s3 = inlined_call_operand.vmem [shape: bf16[32,32], index: 3, kind: input, shape index: {}]
  %s4 = inlined_call_operand.vmem [shape: f32[1,32], index: 4, kind: input, shape index: {}]
  %s5 = inlined_call_operand.vmem [shape: f32[1,32], index: 5, kind: input, shape index: {}]
  %s6 = inlined_call_operand.vmem [shape: f32[1,32], index: 6, kind: input, shape index: {}]
  %s7 = inlined_call_operand.vmem [shape: f32[1,32], index: 7, kind: input, shape index: {}]
  %s8 = inlined_call_operand.hbm [shape: bf16[32,64], index: 8, kind: input, shape index: {}]
  %s9 = inlined_call_operand.vmem [shape: f32[1,64], index: 9, kind: input, shape index: {}]
  %s10 = inlined_call_operand.vmem [shape: bf16[64,32], index: 10, kind: input, shape index: {}]
  %s11 = inlined_call_operand.vmem [shape: f32[1,32], index: 11, kind: input, shape index: {}]
  %s12 = inlined_call_operand.hbm [shape: f32[2,8,32], index: 12, kind: output, shape index: {}]
  %s13 = sld [smem:[#allocation0]]
  $region62: #{tpu_custom_call.1} parent=0
    _
  %s15 = ssub.s32 1, %s13
  %s16 = scalar_select 0, %s15, %s13
  $region1: #{tpu_custom_call.1} parent=0
    #allocation2 [shape = 'u8[8192]{0}', space=vmem, size = 0x2000, scoped, tag = 'input window, operand 8, single buffered']
    #allocation3 [shape = 's32[1]{0}', space=sflag, size = 0x4, scoped, tag = 'scoped memory for tpu_custom_call.1']
    #allocation4 [shape = 's32[1]{0}', space=sflag, size = 0x4, scoped, tag = 'scoped memory for tpu_custom_call.1']
    #allocation5 [shape = 'u8[8192]{0}', space=vmem, size = 0x2000, scoped, tag = 'output window, operand 0, single buffered']
    %17 = vsyncpa [#allocation3], 0
    %18 = vsyncpa [#allocation4], 0
    // Predicated region
    $region2: #{tpu_custom_call.1} parent=1 // pred_check
      _
    $region3: #{tpu_custom_call.1} parent=1 // pred_check_branch
      %20 = sbr.rel (0) target = $region5
    $region4: #{tpu_custom_call.1} parent=1 // pred_region
      _
    $region5: #{tpu_custom_call.1} parent=1 // pred_fallthru
      _
    // Predicated region
    $region6: #{tpu_custom_call.1} parent=1 // pred_check
      _
    $region7: #{tpu_custom_call.1} parent=1 // pred_check_branch
      %22 = sbr.rel (0) target = $region9
    $region8: #{tpu_custom_call.1} parent=1 // pred_region
      _
    $region9: #{tpu_custom_call.1} parent=1 // pred_fallthru
      _
    // Predicated region
    $region10: #{tpu_custom_call.1} parent=1 // pred_check
      _
    $region11: #{tpu_custom_call.1} parent=1 // pred_check_branch
      %24 = sbr.rel (0) target = $region13
    $region12: #{tpu_custom_call.1} parent=1 // pred_region
      _
    $region13: #{tpu_custom_call.1} parent=1 // pred_fallthru
      _
    // Predicated region
    $region14: #{tpu_custom_call.1} parent=1 // pred_check
      _
    $region15: #{tpu_custom_call.1} parent=1 // pred_check_branch
      %26 = sbr.rel (0) target = $region17
    $region16: #{tpu_custom_call.1} parent=1 // pred_region
      _
    $region17: #{tpu_custom_call.1} parent=1 // pred_fallthru
      _
    // Predicated region
    $region18: #{tpu_custom_call.1} parent=1 // pred_check
      _
    $region19: #{tpu_custom_call.1} parent=1 // pred_check_branch
      %28 = sbr.rel (0) target = $region21
    $region20: #{tpu_custom_call.1} parent=1 // pred_region
      _
    $region21: #{tpu_custom_call.1} parent=1 // pred_fallthru
      _
    // Predicated region
    $region22: #{tpu_custom_call.1} parent=1 // pred_check
      _
    $region23: #{tpu_custom_call.1} parent=1 // pred_check_branch
      %30 = sbr.rel (0) target = $region25
    $region24: #{tpu_custom_call.1} parent=1 // pred_region
      _
    $region25: #{tpu_custom_call.1} parent=1 // pred_fallthru
      _
    // Predicated region
    $region26: #{tpu_custom_call.1} parent=1 // pred_check
      _
    $region27: #{tpu_custom_call.1} parent=1 // pred_check_branch
      %32 = sbr.rel (0) target = $region29
    $region28: #{tpu_custom_call.1} parent=1 // pred_region
      _
    $region29: #{tpu_custom_call.1} parent=1 // pred_fallthru
      _
    // Predicated region
    $region30: #{tpu_custom_call.1} parent=1 // pred_check
      _
    $region31: #{tpu_custom_call.1} parent=1 // pred_check_branch
      %34 = sbr.rel (0) target = $region33
    $region32: #{tpu_custom_call.1} parent=1 // pred_region
      _
    $region33: #{tpu_custom_call.1} parent=1 // pred_fallthru
      _
    // Predicated region
    $region34: #{tpu_custom_call.1} parent=1 // pred_check
      _
    $region35: #{tpu_custom_call.1} parent=1 // pred_check_branch
      %36 = sbr.rel (0) target = $region37
    $region36: #{tpu_custom_call.1} parent=1 // pred_region
      %s38 = ssub.s32 256, 256
      %39 = vsyncadd [#allocation3], %s38
      %s40 = sshll.u32 [#allocation2], 4
      %s41 = int_to_ptr.vmem [resolvable:$true] %s40
      %46 = dma.hbm_to_vmem [thread:$0]  %s8, 256, %s41, [#allocation3], 64, 64, 4
    $region37: #{tpu_custom_call.1} parent=1 // pred_fallthru
      _
    // Predicated region
    $region38: #{tpu_custom_call.1} parent=1 // pred_check
      _
    $region39: #{tpu_custom_call.1} parent=1 // pred_check_branch
      %48 = sbr.rel (0) target = $region41
    $region40: #{tpu_custom_call.1} parent=1 // pred_region
      _
    $region41: #{tpu_custom_call.1} parent=1 // pred_fallthru
      _
    // Predicated region
    $region42: #{tpu_custom_call.1} parent=1 // pred_check
      _
    $region43: #{tpu_custom_call.1} parent=1 // pred_check_branch
      %50 = sbr.rel (0) target = $region45
    $region44: #{tpu_custom_call.1} parent=1 // pred_region
      _
    $region45: #{tpu_custom_call.1} parent=1 // pred_fallthru
      _
    // Predicated region
    $region46: #{tpu_custom_call.1} parent=1 // pred_check
      _
    $region47: #{tpu_custom_call.1} parent=1 // pred_check_branch
      %52 = sbr.rel (0) target = $region49
    $region48: #{tpu_custom_call.1} parent=1 // pred_region
      _
    $region49: #{tpu_custom_call.1} parent=1 // pred_fallthru
      _
    // Predicated region
    $region50: #{tpu_custom_call.1} parent=1 // pred_check
      _
    $region51: #{tpu_custom_call.1} parent=1 // pred_check_branch
      %54 = sbr.rel (0) target = $region53
    $region52: #{tpu_custom_call.1} parent=1 // pred_region
      %55 = dma.done [#allocation3], 256
    $region53: #{tpu_custom_call.1} parent=1 // pred_fallthru
      _
    %v57 = vld [vmem:[%s0] sm:$0xff]
    %v58 = vld [vmem:[%s0 + $0x8] sm:$0xff]
    %v59 = vld [vmem:[%s4] sm:$0x1]
    %v60 = vld [vmem:[%s5] sm:$0x1]
    %vm61 = vcmask 261120
    %v62 = vsel %vm61, %v57, 0.0
    %63 = vadd.xlane.f32.xlu0 %v62
    %v64 = vpop.xlane.xlu0 %63
    %v65 = vsel %vm61, %v58, 0.0
    %66 = vadd.xlane.f32.xlu0 %v65
    %v67 = vpop.xlane.xlu0 %66
    %v68 = vrcp.pop 32.0
    %v69 = vmul.f32 %v64, %v68
    %v70 = vmul.f32 %v67, %v68
    %v71 = vsub.f32 %v57, %v69
    %v72 = vsub.f32 %v58, %v70
    %v73 = vmul.f32 %v71, %v71
    %v74 = vmul.f32 %v72, %v72
    %v75 = vsel %vm61, %v73, 0.0
    %76 = vadd.xlane.f32.xlu0 %v75
    %v77 = vpop.xlane.xlu0 %76
    %v78 = vsel %vm61, %v74, 0.0
    %79 = vadd.xlane.f32.xlu0 %v78
    %v80 = vpop.xlane.xlu0 %79
    %v81 = vmul.f32 %v77, %v68
    %v82 = vmul.f32 %v80, %v68
    %v83 = vadd.f32 %v81, 1e-05
    %v84 = vadd.f32 %v82, 1e-05
    %v85 = vrsqrt.pop %v83
    %v86 = vrsqrt.pop %v84
    %v87 = vmul.f32 %v71, %v85
    %v88 = vmul.f32 %v72, %v86
    %v90 = vlaneseq
    %v91 = vshrl.u32 %v90, 7
    %v92 = vsub.s32 0, %v91
    %v93 = vrot.slane %v59, %v92
    %v95 = vmul.f32 %v87, %v93
    %v96 = vmul.f32 %v88, %v93
    %v98 = vlaneseq
    %v99 = vshrl.u32 %v98, 7
    %v100 = vsub.s32 0, %v99
    %v101 = vrot.slane %v60, %v100
    %v103 = vadd.f32 %v95, %v101
    %v104 = vadd.f32 %v96, %v101
    %v105 = vpack.c.bf16 %v104, %v103
    %v106 = vld [vmem:[%s2] sm:$0xf]
    %v107 = vld [vmem:[%s2 + $0x4] sm:$0xf]
    %v108 = vld [vmem:[%s2 + $0x8] sm:$0xf]
    %v109 = vld [vmem:[%s2 + $0xc] sm:$0xf]
    %v114 = vunpack.c.l.b16 %v106
    %v115 = vunpack.c.l.b16 %v107
    %v116 = vunpack.c.l.b16 %v108
    %v117 = vunpack.c.l.b16 %v109
    %v118 = vpack.c.b16 %v115, %v114
    %v119 = vpack.c.b16 %v117, %v116
    %v123 = vsel %vm61, %v105, 0
    %125 = vmatprep.subr.bf16.mxu0 0
    %126 = vmatpush1.bf16.msra.mxu0 %v118
    %127 = vmatprep.subr.bf16.mxu0 0
    %128 = vmatpush1.bf16.msra.mxu0 %v119
    %129 = vmatprep.subr.bf16.mxu0 0
    %130 = vmatpush1.bf16.msra.mxu0 0
    %131 = vmatprep.subr.bf16.mxu0 0
    %132 = vmatpush1.bf16.msra.mxu0 0
    %133 = vmatprep.subr.bf16.mxu0 0
    %134 = vmatpush1.bf16.msra.mxu0 0
    %135 = vmatprep.subr.bf16.mxu0 0
    %136 = vmatpush1.bf16.msra.mxu0 0
    %137 = vmatprep.subr.bf16.mxu0 0
    %138 = vmatpush1.bf16.msra.mxu0 0
    %139 = vmatprep.subr.bf16.mxu0 0
    %140 = vmatpush1.bf16.msra.mxu0 0
    %141 = vmatprep.subr.bf16.mxu0 0
    %142 = vmatpush1.bf16.msra.mxu0 0
    %143 = vmatprep.subr.bf16.mxu0 0
    %144 = vmatpush1.bf16.msra.mxu0 0
    %145 = vmatprep.subr.bf16.mxu0 0
    %146 = vmatpush1.bf16.msra.mxu0 0
    %147 = vmatprep.subr.bf16.mxu0 0
    %148 = vmatpush1.bf16.msra.mxu0 0
    %149 = vmatprep.subr.bf16.mxu0 0
    %150 = vmatpush1.bf16.msra.mxu0 0
    %151 = vmatprep.subr.bf16.mxu0 0
    %152 = vmatpush1.bf16.msra.mxu0 0
    %153 = vmatprep.subr.bf16.mxu0 0
    %154 = vmatpush1.bf16.msra.mxu0 0
    %155 = vmatprep.subr.bf16.mxu0 0
    %156 = vmatpush1.bf16.msra.mxu0 0
    %157 = vmatprep.mubr.bf16.mxu0 0
    %158 = vmatmul.mubr.bf16.gmra.mrb[0].mxu0 %v123
    %v159 = vpop.f32.mrb[0].mxu0
    %v160 = vadd.f32 0.0, %v159
    %v161 = vpop.f32.mrb[0].mxu0
    %v162 = vpop.f32.mrb[0].mxu0
    %v163 = vadd.f32 0.0, %v162
    %v164 = vpop.f32.mrb[0].mxu0
    %165 = vdwg.mxu0
    %v166 = vpack.c.bf16 %v163, %v160
    %v168 = vunpack.c.l.b16 %v166
    %v169 = vunpack.c.h.b16 %v166
    %v170 = vpack.c.b16 %v168, %v168
    %v171 = vpack.c.b16 %v169, %v169
    %v172 = vld [vmem:[%s1] sm:$0x1]
    %v173 = vld [vmem:[%s1 + $0x1] sm:$0x1]
    %v176 = vlaneseq
    %v177 = vshrl.u32 %v176, 7
    %v178 = vsub.s32 0, %v177
    %v179 = vrot.slane %v172, %v178
    %v180 = vlaneseq
    %v181 = vshrl.u32 %v180, 7
    %v182 = vsub.s32 0, %v181
    %v183 = vrot.slane %v173, %v182
    %186 = vrot.lane.b32.xlu0 %v170, 96
    %v187 = vpop.permute.xlu0 %186
    %vm188 = vcmask 64512
    %v190 = vsel %vm188, %v170, 0
    %v193 = vsel %vm188, %v187, 0
    %195 = vmatprep.subr.bf16.mxu0 0
    %196 = vmatpush1.bf16.xpose.msra.mxu0 %v193
    %197 = vmatprep.subr.bf16.mxu0 0
    %198 = vmatpush1.bf16.xpose.msra.mxu0 0
    %199 = vmatprep.subr.bf16.mxu0 0
    %200 = vmatpush1.bf16.xpose.msra.mxu0 0
    %201 = vmatprep.subr.bf16.mxu0 0
    %202 = vmatpush1.bf16.xpose.msra.mxu0 0
    %203 = vmatprep.subr.bf16.mxu0 0
    %204 = vmatpush1.bf16.xpose.msra.mxu0 0
    %205 = vmatprep.subr.bf16.mxu0 0
    %206 = vmatpush1.bf16.xpose.msra.mxu0 0
    %207 = vmatprep.subr.bf16.mxu0 0
    %208 = vmatpush1.bf16.xpose.msra.mxu0 0
    %209 = vmatprep.subr.bf16.mxu0 0
    %210 = vmatpush1.bf16.xpose.msra.mxu0 0
    %211 = vmatprep.subr.bf16.mxu0 0
    %212 = vmatpush1.bf16.xpose.msra.mxu0 0
    %213 = vmatprep.subr.bf16.mxu0 0
    %214 = vmatpush1.bf16.xpose.msra.mxu0 0
    %215 = vmatprep.subr.bf16.mxu0 0
    %216 = vmatpush1.bf16.xpose.msra.mxu0 0
    %217 = vmatprep.subr.bf16.mxu0 0
    %218 = vmatpush1.bf16.xpose.msra.mxu0 0
    %219 = vmatprep.subr.bf16.mxu0 0
    %220 = vmatpush1.bf16.xpose.msra.mxu0 0
    %221 = vmatprep.subr.bf16.mxu0 0
    %222 = vmatpush1.bf16.xpose.msra.mxu0 0
    %223 = vmatprep.subr.bf16.mxu0 0
    %224 = vmatpush1.bf16.xpose.msra.mxu0 0
    %225 = vmatprep.subr.bf16.mxu0 0
    %226 = vmatpush1.bf16.xpose.msra.mxu0 0
    %227 = vmatprep.mubr.bf16.mxu0 0
    %228 = vmatmul.mubr.bf16.gmra.mrb[0].mxu0 %v190
    %v229 = vpop.f32.mrb[0].mxu0
    %v230 = vadd.f32 %v179, %v229
    %v231 = vpop.f32.mrb[0].mxu0
    %v232 = vpop.f32.mrb[0].mxu0
    %v233 = vpop.f32.mrb[0].mxu0
    %234 = vdwg.mxu0
    %235 = vrot.lane.b32.xlu0 %v171, 96
    %v236 = vpop.permute.xlu0 %235
    %v238 = vsel %vm188, %v171, 0
    %v241 = vsel %vm188, %v236, 0
    %243 = vmatprep.subr.bf16.mxu0 0
    %244 = vmatpush1.bf16.xpose.msra.mxu0 %v241
    %245 = vmatprep.subr.bf16.mxu0 0
    %246 = vmatpush1.bf16.xpose.msra.mxu0 0
    %247 = vmatprep.subr.bf16.mxu0 0
    %248 = vmatpush1.bf16.xpose.msra.mxu0 0
    %249 = vmatprep.subr.bf16.mxu0 0
    %250 = vmatpush1.bf16.xpose.msra.mxu0 0
    %251 = vmatprep.subr.bf16.mxu0 0
    %252 = vmatpush1.bf16.xpose.msra.mxu0 0
    %253 = vmatprep.subr.bf16.mxu0 0
    %254 = vmatpush1.bf16.xpose.msra.mxu0 0
    %255 = vmatprep.subr.bf16.mxu0 0
    %256 = vmatpush1.bf16.xpose.msra.mxu0 0
    %257 = vmatprep.subr.bf16.mxu0 0
    %258 = vmatpush1.bf16.xpose.msra.mxu0 0
    %259 = vmatprep.subr.bf16.mxu0 0
    %260 = vmatpush1.bf16.xpose.msra.mxu0 0
    %261 = vmatprep.subr.bf16.mxu0 0
    %262 = vmatpush1.bf16.xpose.msra.mxu0 0
    %263 = vmatprep.subr.bf16.mxu0 0
    %264 = vmatpush1.bf16.xpose.msra.mxu0 0
    %265 = vmatprep.subr.bf16.mxu0 0
    %266 = vmatpush1.bf16.xpose.msra.mxu0 0
    %267 = vmatprep.subr.bf16.mxu0 0
    %268 = vmatpush1.bf16.xpose.msra.mxu0 0
    %269 = vmatprep.subr.bf16.mxu0 0
    %270 = vmatpush1.bf16.xpose.msra.mxu0 0
    %271 = vmatprep.subr.bf16.mxu0 0
    %272 = vmatpush1.bf16.xpose.msra.mxu0 0
    %273 = vmatprep.subr.bf16.mxu0 0
    %274 = vmatpush1.bf16.xpose.msra.mxu0 0
    %275 = vmatprep.mubr.bf16.mxu0 0
    %276 = vmatmul.mubr.bf16.gmra.mrb[0].mxu0 %v238
    %v277 = vpop.f32.mrb[0].mxu0
    %v278 = vadd.f32 %v183, %v277
    %v279 = vpop.f32.mrb[0].mxu0
    %v280 = vpop.f32.mrb[0].mxu0
    %v281 = vpop.f32.mrb[0].mxu0
    %282 = vdwg.mxu0
    %v283 = vsel %vm188, %v230, -inf
    %284 = vmax.xlane.f32.xlu0 %v283
    %v285 = vpop.xlane.xlu0 %284
    %v286 = vsel %vm188, %v278, -inf
    %287 = vmax.xlane.f32.xlu0 %v286
    %v288 = vpop.xlane.xlu0 %287
    %v289 = vsub.f32 %v230, %v285
    %v290 = vsub.f32 %v278, %v288
    %v291 = vmul.f32 %v289, 1.442695
    %v292 = vpow.pop %v291
    %v293 = vmul.f32 %v290, 1.442695
    %v294 = vpow.pop %v293
    %v295 = vsel %vm188, %v292, 0.0
    %296 = vadd.xlane.f32.xlu0 %v295
    %v297 = vpop.xlane.xlu0 %296
    %v298 = vsel %vm188, %v294, 0.0
    %299 = vadd.xlane.f32.xlu0 %v298
    %v300 = vpop.xlane.xlu0 %299
    %v301 = vrcp.pop %v297
    %v302 = vrcp.pop %v300
    %v303 = vmul.f32 %v292, %v301
    %v304 = vmul.f32 %v294, %v302
    %v305 = vpack.c.bf16 %v303, %v303
    %v306 = vpack.c.bf16 %v304, %v304
    %307 = vrot.lane.b32.xlu0 %v170, 64
    %v308 = vpop.permute.xlu0 %307
    %v310 = vsel %vm188, %v305, 0
    %vm312 = vcmask 1043456
    %v314 = vsel %vm312, %v308, 0
    %316 = vmatprep.subr.bf16.mxu0 0
    %317 = vmatpush1.bf16.msra.mxu0 %v314
    %318 = vmatprep.subr.bf16.mxu0 0
    %319 = vmatpush1.bf16.msra.mxu0 0
    %320 = vmatprep.subr.bf16.mxu0 0
    %321 = vmatpush1.bf16.msra.mxu0 0
    %322 = vmatprep.subr.bf16.mxu0 0
    %323 = vmatpush1.bf16.msra.mxu0 0
    %324 = vmatprep.subr.bf16.mxu0 0
    %325 = vmatpush1.bf16.msra.mxu0 0
    %326 = vmatprep.subr.bf16.mxu0 0
    %327 = vmatpush1.bf16.msra.mxu0 0
    %328 = vmatprep.subr.bf16.mxu0 0
    %329 = vmatpush1.bf16.msra.mxu0 0
    %330 = vmatprep.subr.bf16.mxu0 0
    %331 = vmatpush1.bf16.msra.mxu0 0
    %332 = vmatprep.subr.bf16.mxu0 0
    %333 = vmatpush1.bf16.msra.mxu0 0
    %334 = vmatprep.subr.bf16.mxu0 0
    %335 = vmatpush1.bf16.msra.mxu0 0
    %336 = vmatprep.subr.bf16.mxu0 0
    %337 = vmatpush1.bf16.msra.mxu0 0
    %338 = vmatprep.subr.bf16.mxu0 0
    %339 = vmatpush1.bf16.msra.mxu0 0
    %340 = vmatprep.subr.bf16.mxu0 0
    %341 = vmatpush1.bf16.msra.mxu0 0
    %342 = vmatprep.subr.bf16.mxu0 0
    %343 = vmatpush1.bf16.msra.mxu0 0
    %344 = vmatprep.subr.bf16.mxu0 0
    %345 = vmatpush1.bf16.msra.mxu0 0
    %346 = vmatprep.subr.bf16.mxu0 0
    %347 = vmatpush1.bf16.msra.mxu0 0
    %348 = vmatprep.mubr.bf16.mxu0 0
    %349 = vmatmul.mubr.bf16.gmra.mrb[0].mxu0 %v310
    %v350 = vpop.f32.mrb[0].mxu0
    %v351 = vadd.f32 0.0, %v350
    %v352 = vpop.f32.mrb[0].mxu0
    %v353 = vpop.f32.mrb[0].mxu0
    %v354 = vpop.f32.mrb[0].mxu0
    %355 = vdwg.mxu0
    %356 = vrot.lane.b32.xlu0 %v171, 64
    %v357 = vpop.permute.xlu0 %356
    %v359 = vsel %vm188, %v306, 0
    %v362 = vsel %vm312, %v357, 0
    %364 = vmatprep.subr.bf16.mxu0 0
    %365 = vmatpush1.bf16.msra.mxu0 %v362
    %366 = vmatprep.subr.bf16.mxu0 0
    %367 = vmatpush1.bf16.msra.mxu0 0
    %368 = vmatprep.subr.bf16.mxu0 0
    %369 = vmatpush1.bf16.msra.mxu0 0
    %370 = vmatprep.subr.bf16.mxu0 0
    %371 = vmatpush1.bf16.msra.mxu0 0
    %372 = vmatprep.subr.bf16.mxu0 0
    %373 = vmatpush1.bf16.msra.mxu0 0
    %374 = vmatprep.subr.bf16.mxu0 0
    %375 = vmatpush1.bf16.msra.mxu0 0
    %376 = vmatprep.subr.bf16.mxu0 0
    %377 = vmatpush1.bf16.msra.mxu0 0
    %378 = vmatprep.subr.bf16.mxu0 0
    %379 = vmatpush1.bf16.msra.mxu0 0
    %380 = vmatprep.subr.bf16.mxu0 0
    %381 = vmatpush1.bf16.msra.mxu0 0
    %382 = vmatprep.subr.bf16.mxu0 0
    %383 = vmatpush1.bf16.msra.mxu0 0
    %384 = vmatprep.subr.bf16.mxu0 0
    %385 = vmatpush1.bf16.msra.mxu0 0
    %386 = vmatprep.subr.bf16.mxu0 0
    %387 = vmatpush1.bf16.msra.mxu0 0
    %388 = vmatprep.subr.bf16.mxu0 0
    %389 = vmatpush1.bf16.msra.mxu0 0
    %390 = vmatprep.subr.bf16.mxu0 0
    %391 = vmatpush1.bf16.msra.mxu0 0
    %392 = vmatprep.subr.bf16.mxu0 0
    %393 = vmatpush1.bf16.msra.mxu0 0
    %394 = vmatprep.subr.bf16.mxu0 0
    %395 = vmatpush1.bf16.msra.mxu0 0
    %396 = vmatprep.mubr.bf16.mxu0 0
    %397 = vmatmul.mubr.bf16.gmra.mrb[0].mxu0 %v359
    %v398 = vpop.f32.mrb[0].mxu0
    %v399 = vadd.f32 0.0, %v398
    %v400 = vpop.f32.mrb[0].mxu0
    %v401 = vpop.f32.mrb[0].mxu0
    %v402 = vpop.f32.mrb[0].mxu0
    %403 = vdwg.mxu0
    %404 = vrot.lane.b32.xlu0 %v170, 120
    %v405 = vpop.permute.xlu0 %404
    %406 = vrot.lane.b32.xlu0 %v170, 88
    %v407 = vpop.permute.xlu0 %406
    %v409 = vsel %vm188, %v405, 0
    %v412 = vsel %vm188, %v407, 0
    %414 = vmatprep.subr.bf16.mxu0 0
    %415 = vmatpush1.bf16.xpose.msra.mxu0 %v412
    %416 = vmatprep.subr.bf16.mxu0 0
    %417 = vmatpush1.bf16.xpose.msra.mxu0 0
    %418 = vmatprep.subr.bf16.mxu0 0
    %419 = vmatpush1.bf16.xpose.msra.mxu0 0
    %420 = vmatprep.subr.bf16.mxu0 0
    %421 = vmatpush1.bf16.xpose.msra.mxu0 0
    %422 = vmatprep.subr.bf16.mxu0 0
    %423 = vmatpush1.bf16.xpose.msra.mxu0 0
    %424 = vmatprep.subr.bf16.mxu0 0
    %425 = vmatpush1.bf16.xpose.msra.mxu0 0
    %426 = vmatprep.subr.bf16.mxu0 0
    %427 = vmatpush1.bf16.xpose.msra.mxu0 0
    %428 = vmatprep.subr.bf16.mxu0 0
    %429 = vmatpush1.bf16.xpose.msra.mxu0 0
    %430 = vmatprep.subr.bf16.mxu0 0
    %431 = vmatpush1.bf16.xpose.msra.mxu0 0
    %432 = vmatprep.subr.bf16.mxu0 0
    %433 = vmatpush1.bf16.xpose.msra.mxu0 0
    %434 = vmatprep.subr.bf16.mxu0 0
    %435 = vmatpush1.bf16.xpose.msra.mxu0 0
    %436 = vmatprep.subr.bf16.mxu0 0
    %437 = vmatpush1.bf16.xpose.msra.mxu0 0
    %438 = vmatprep.subr.bf16.mxu0 0
    %439 = vmatpush1.bf16.xpose.msra.mxu0 0
    %440 = vmatprep.subr.bf16.mxu0 0
    %441 = vmatpush1.bf16.xpose.msra.mxu0 0
    %442 = vmatprep.subr.bf16.mxu0 0
    %443 = vmatpush1.bf16.xpose.msra.mxu0 0
    %444 = vmatprep.subr.bf16.mxu0 0
    %445 = vmatpush1.bf16.xpose.msra.mxu0 0
    %446 = vmatprep.mubr.bf16.mxu0 0
    %447 = vmatmul.mubr.bf16.gmra.mrb[0].mxu0 %v409
    %v448 = vpop.f32.mrb[0].mxu0
    %v449 = vadd.f32 %v179, %v448
    %v450 = vpop.f32.mrb[0].mxu0
    %v451 = vpop.f32.mrb[0].mxu0
    %v452 = vpop.f32.mrb[0].mxu0
    %453 = vdwg.mxu0
    %454 = vrot.lane.b32.xlu0 %v171, 120
    %v455 = vpop.permute.xlu0 %454
    %456 = vrot.lane.b32.xlu0 %v171, 88
    %v457 = vpop.permute.xlu0 %456
    %v459 = vsel %vm188, %v455, 0
    %v462 = vsel %vm188, %v457, 0
    %464 = vmatprep.subr.bf16.mxu0 0
    %465 = vmatpush1.bf16.xpose.msra.mxu0 %v462
    %466 = vmatprep.subr.bf16.mxu0 0
    %467 = vmatpush1.bf16.xpose.msra.mxu0 0
    %468 = vmatprep.subr.bf16.mxu0 0
    %469 = vmatpush1.bf16.xpose.msra.mxu0 0
    %470 = vmatprep.subr.bf16.mxu0 0
    %471 = vmatpush1.bf16.xpose.msra.mxu0 0
    %472 = vmatprep.subr.bf16.mxu0 0
    %473 = vmatpush1.bf16.xpose.msra.mxu0 0
    %474 = vmatprep.subr.bf16.mxu0 0
    %475 = vmatpush1.bf16.xpose.msra.mxu0 0
    %476 = vmatprep.subr.bf16.mxu0 0
    %477 = vmatpush1.bf16.xpose.msra.mxu0 0
    %478 = vmatprep.subr.bf16.mxu0 0
    %479 = vmatpush1.bf16.xpose.msra.mxu0 0
    %480 = vmatprep.subr.bf16.mxu0 0
    %481 = vmatpush1.bf16.xpose.msra.mxu0 0
    %482 = vmatprep.subr.bf16.mxu0 0
    %483 = vmatpush1.bf16.xpose.msra.mxu0 0
    %484 = vmatprep.subr.bf16.mxu0 0
    %485 = vmatpush1.bf16.xpose.msra.mxu0 0
    %486 = vmatprep.subr.bf16.mxu0 0
    %487 = vmatpush1.bf16.xpose.msra.mxu0 0
    %488 = vmatprep.subr.bf16.mxu0 0
    %489 = vmatpush1.bf16.xpose.msra.mxu0 0
    %490 = vmatprep.subr.bf16.mxu0 0
    %491 = vmatpush1.bf16.xpose.msra.mxu0 0
    %492 = vmatprep.subr.bf16.mxu0 0
    %493 = vmatpush1.bf16.xpose.msra.mxu0 0
    %494 = vmatprep.subr.bf16.mxu0 0
    %495 = vmatpush1.bf16.xpose.msra.mxu0 0
    %496 = vmatprep.mubr.bf16.mxu0 0
    %497 = vmatmul.mubr.bf16.gmra.mrb[0].mxu0 %v459
    %v498 = vpop.f32.mrb[0].mxu0
    %v499 = vadd.f32 %v183, %v498
    %v500 = vpop.f32.mrb[0].mxu0
    %v501 = vpop.f32.mrb[0].mxu0
    %v502 = vpop.f32.mrb[0].mxu0
    %503 = vdwg.mxu0
    %v504 = vsel %vm188, %v449, -inf
    %505 = vmax.xlane.f32.xlu0 %v504
    %v506 = vpop.xlane.xlu0 %505
    %v507 = vsel %vm188, %v499, -inf
    %508 = vmax.xlane.f32.xlu0 %v507
    %v509 = vpop.xlane.xlu0 %508
    %v510 = vsub.f32 %v449, %v506
    %v511 = vsub.f32 %v499, %v509
    %v512 = vmul.f32 %v510, 1.442695
    %v513 = vpow.pop %v512
    %v514 = vmul.f32 %v511, 1.442695
    %v515 = vpow.pop %v514
    %v516 = vsel %vm188, %v513, 0.0
    %517 = vadd.xlane.f32.xlu0 %v516
    %v518 = vpop.xlane.xlu0 %517
    %v519 = vsel %vm188, %v515, 0.0
    %520 = vadd.xlane.f32.xlu0 %v519
    %v521 = vpop.xlane.xlu0 %520
    %v522 = vrcp.pop %v518
    %v523 = vrcp.pop %v521
    %v524 = vmul.f32 %v513, %v522
    %v525 = vmul.f32 %v515, %v523
    %v526 = vpack.c.bf16 %v524, %v524
    %v527 = vpack.c.bf16 %v525, %v525
    %528 = vrot.lane.b32.xlu0 %v170, 56
    %v529 = vpop.permute.xlu0 %528
    %v531 = vsel %vm188, %v526, 0
    %v534 = vsel %vm312, %v529, 0
    %536 = vmatprep.subr.bf16.mxu0 0
    %537 = vmatpush1.bf16.msra.mxu0 %v534
    %538 = vmatprep.subr.bf16.mxu0 0
    %539 = vmatpush1.bf16.msra.mxu0 0
    %540 = vmatprep.subr.bf16.mxu0 0
    %541 = vmatpush1.bf16.msra.mxu0 0
    %542 = vmatprep.subr.bf16.mxu0 0
    %543 = vmatpush1.bf16.msra.mxu0 0
    %544 = vmatprep.subr.bf16.mxu0 0
    %545 = vmatpush1.bf16.msra.mxu0 0
    %546 = vmatprep.subr.bf16.mxu0 0
    %547 = vmatpush1.bf16.msra.mxu0 0
    %548 = vmatprep.subr.bf16.mxu0 0
    %549 = vmatpush1.bf16.msra.mxu0 0
    %550 = vmatprep.subr.bf16.mxu0 0
    %551 = vmatpush1.bf16.msra.mxu0 0
    %552 = vmatprep.subr.bf16.mxu0 0
    %553 = vmatpush1.bf16.msra.mxu0 0
    %554 = vmatprep.subr.bf16.mxu0 0
    %555 = vmatpush1.bf16.msra.mxu0 0
    %556 = vmatprep.subr.bf16.mxu0 0
    %557 = vmatpush1.bf16.msra.mxu0 0
    %558 = vmatprep.subr.bf16.mxu0 0
    %559 = vmatpush1.bf16.msra.mxu0 0
    %560 = vmatprep.subr.bf16.mxu0 0
    %561 = vmatpush1.bf16.msra.mxu0 0
    %562 = vmatprep.subr.bf16.mxu0 0
    %563 = vmatpush1.bf16.msra.mxu0 0
    %564 = vmatprep.subr.bf16.mxu0 0
    %565 = vmatpush1.bf16.msra.mxu0 0
    %566 = vmatprep.subr.bf16.mxu0 0
    %567 = vmatpush1.bf16.msra.mxu0 0
    %568 = vmatprep.mubr.bf16.mxu0 0
    %569 = vmatmul.mubr.bf16.gmra.mrb[0].mxu0 %v531
    %v570 = vpop.f32.mrb[0].mxu0
    %v571 = vadd.f32 0.0, %v570
    %v572 = vpop.f32.mrb[0].mxu0
    %v573 = vpop.f32.mrb[0].mxu0
    %v574 = vpop.f32.mrb[0].mxu0
    %575 = vdwg.mxu0
    %576 = vrot.lane.b32.xlu0 %v171, 56
    %v577 = vpop.permute.xlu0 %576
    %v579 = vsel %vm188, %v527, 0
    %v582 = vsel %vm312, %v577, 0
    %584 = vmatprep.subr.bf16.mxu0 0
    %585 = vmatpush1.bf16.msra.mxu0 %v582
    %586 = vmatprep.subr.bf16.mxu0 0
    %587 = vmatpush1.bf16.msra.mxu0 0
    %588 = vmatprep.subr.bf16.mxu0 0
    %589 = vmatpush1.bf16.msra.mxu0 0
    %590 = vmatprep.subr.bf16.mxu0 0
    %591 = vmatpush1.bf16.msra.mxu0 0
    %592 = vmatprep.subr.bf16.mxu0 0
    %593 = vmatpush1.bf16.msra.mxu0 0
    %594 = vmatprep.subr.bf16.mxu0 0
    %595 = vmatpush1.bf16.msra.mxu0 0
    %596 = vmatprep.subr.bf16.mxu0 0
    %597 = vmatpush1.bf16.msra.mxu0 0
    %598 = vmatprep.subr.bf16.mxu0 0
    %599 = vmatpush1.bf16.msra.mxu0 0
    %600 = vmatprep.subr.bf16.mxu0 0
    %601 = vmatpush1.bf16.msra.mxu0 0
    %602 = vmatprep.subr.bf16.mxu0 0
    %603 = vmatpush1.bf16.msra.mxu0 0
    %604 = vmatprep.subr.bf16.mxu0 0
    %605 = vmatpush1.bf16.msra.mxu0 0
    %606 = vmatprep.subr.bf16.mxu0 0
    %607 = vmatpush1.bf16.msra.mxu0 0
    %608 = vmatprep.subr.bf16.mxu0 0
    %609 = vmatpush1.bf16.msra.mxu0 0
    %610 = vmatprep.subr.bf16.mxu0 0
    %611 = vmatpush1.bf16.msra.mxu0 0
    %612 = vmatprep.subr.bf16.mxu0 0
    %613 = vmatpush1.bf16.msra.mxu0 0
    %614 = vmatprep.subr.bf16.mxu0 0
    %615 = vmatpush1.bf16.msra.mxu0 0
    %616 = vmatprep.mubr.bf16.mxu0 0
    %617 = vmatmul.mubr.bf16.gmra.mrb[0].mxu0 %v579
    %v618 = vpop.f32.mrb[0].mxu0
    %v619 = vadd.f32 0.0, %v618
    %v620 = vpop.f32.mrb[0].mxu0
    %v621 = vpop.f32.mrb[0].mxu0
    %v622 = vpop.f32.mrb[0].mxu0
    %623 = vdwg.mxu0
    %624 = vrot.lane.b32.xlu0 %v170, 112
    %v625 = vpop.permute.xlu0 %624
    %626 = vrot.lane.b32.xlu0 %v170, 80
    %v627 = vpop.permute.xlu0 %626
    %v629 = vsel %vm188, %v625, 0
    %v632 = vsel %vm188, %v627, 0
    %634 = vmatprep.subr.bf16.mxu0 0
    %635 = vmatpush1.bf16.xpose.msra.mxu0 %v632
    %636 = vmatprep.subr.bf16.mxu0 0
    %637 = vmatpush1.bf16.xpose.msra.mxu0 0
    %638 = vmatprep.subr.bf16.mxu0 0
    %639 = vmatpush1.bf16.xpose.msra.mxu0 0
    %640 = vmatprep.subr.bf16.mxu0 0
    %641 = vmatpush1.bf16.xpose.msra.mxu0 0
    %642 = vmatprep.subr.bf16.mxu0 0
    %643 = vmatpush1.bf16.xpose.msra.mxu0 0
    %644 = vmatprep.subr.bf16.mxu0 0
    %645 = vmatpush1.bf16.xpose.msra.mxu0 0
    %646 = vmatprep.subr.bf16.mxu0 0
    %647 = vmatpush1.bf16.xpose.msra.mxu0 0
    %648 = vmatprep.subr.bf16.mxu0 0
    %649 = vmatpush1.bf16.xpose.msra.mxu0 0
    %650 = vmatprep.subr.bf16.mxu0 0
    %651 = vmatpush1.bf16.xpose.msra.mxu0 0
    %652 = vmatprep.subr.bf16.mxu0 0
    %653 = vmatpush1.bf16.xpose.msra.mxu0 0
    %654 = vmatprep.subr.bf16.mxu0 0
    %655 = vmatpush1.bf16.xpose.msra.mxu0 0
    %656 = vmatprep.subr.bf16.mxu0 0
    %657 = vmatpush1.bf16.xpose.msra.mxu0 0
    %658 = vmatprep.subr.bf16.mxu0 0
    %659 = vmatpush1.bf16.xpose.msra.mxu0 0
    %660 = vmatprep.subr.bf16.mxu0 0
    %661 = vmatpush1.bf16.xpose.msra.mxu0 0
    %662 = vmatprep.subr.bf16.mxu0 0
    %663 = vmatpush1.bf16.xpose.msra.mxu0 0
    %664 = vmatprep.subr.bf16.mxu0 0
    %665 = vmatpush1.bf16.xpose.msra.mxu0 0
    %666 = vmatprep.mubr.bf16.mxu0 0
    %667 = vmatmul.mubr.bf16.gmra.mrb[0].mxu0 %v629
    %v668 = vpop.f32.mrb[0].mxu0
    %v669 = vadd.f32 %v179, %v668
    %v670 = vpop.f32.mrb[0].mxu0
    %v671 = vpop.f32.mrb[0].mxu0
    %v672 = vpop.f32.mrb[0].mxu0
    %673 = vdwg.mxu0
    %674 = vrot.lane.b32.xlu0 %v171, 112
    %v675 = vpop.permute.xlu0 %674
    %676 = vrot.lane.b32.xlu0 %v171, 80
    %v677 = vpop.permute.xlu0 %676
    %v679 = vsel %vm188, %v675, 0
    %v682 = vsel %vm188, %v677, 0
    %684 = vmatprep.subr.bf16.mxu0 0
    %685 = vmatpush1.bf16.xpose.msra.mxu0 %v682
    %686 = vmatprep.subr.bf16.mxu0 0
    %687 = vmatpush1.bf16.xpose.msra.mxu0 0
    %688 = vmatprep.subr.bf16.mxu0 0
    %689 = vmatpush1.bf16.xpose.msra.mxu0 0
    %690 = vmatprep.subr.bf16.mxu0 0
    %691 = vmatpush1.bf16.xpose.msra.mxu0 0
    %692 = vmatprep.subr.bf16.mxu0 0
    %693 = vmatpush1.bf16.xpose.msra.mxu0 0
    %694 = vmatprep.subr.bf16.mxu0 0
    %695 = vmatpush1.bf16.xpose.msra.mxu0 0
    %696 = vmatprep.subr.bf16.mxu0 0
    %697 = vmatpush1.bf16.xpose.msra.mxu0 0
    %698 = vmatprep.subr.bf16.mxu0 0
    %699 = vmatpush1.bf16.xpose.msra.mxu0 0
    %700 = vmatprep.subr.bf16.mxu0 0
    %701 = vmatpush1.bf16.xpose.msra.mxu0 0
    %702 = vmatprep.subr.bf16.mxu0 0
    %703 = vmatpush1.bf16.xpose.msra.mxu0 0
    %704 = vmatprep.subr.bf16.mxu0 0
    %705 = vmatpush1.bf16.xpose.msra.mxu0 0
    %706 = vmatprep.subr.bf16.mxu0 0
    %707 = vmatpush1.bf16.xpose.msra.mxu0 0
    %708 = vmatprep.subr.bf16.mxu0 0
    %709 = vmatpush1.bf16.xpose.msra.mxu0 0
    %710 = vmatprep.subr.bf16.mxu0 0
    %711 = vmatpush1.bf16.xpose.msra.mxu0 0
    %712 = vmatprep.subr.bf16.mxu0 0
    %713 = vmatpush1.bf16.xpose.msra.mxu0 0
    %714 = vmatprep.subr.bf16.mxu0 0
    %715 = vmatpush1.bf16.xpose.msra.mxu0 0
    %716 = vmatprep.mubr.bf16.mxu0 0
    %717 = vmatmul.mubr.bf16.gmra.mrb[0].mxu0 %v679
    %v718 = vpop.f32.mrb[0].mxu0
    %v719 = vadd.f32 %v183, %v718
    %v720 = vpop.f32.mrb[0].mxu0
    %v721 = vpop.f32.mrb[0].mxu0
    %v722 = vpop.f32.mrb[0].mxu0
    %723 = vdwg.mxu0
    %v724 = vsel %vm188, %v669, -inf
    %725 = vmax.xlane.f32.xlu0 %v724
    %v726 = vpop.xlane.xlu0 %725
    %v727 = vsel %vm188, %v719, -inf
    %728 = vmax.xlane.f32.xlu0 %v727
    %v729 = vpop.xlane.xlu0 %728
    %v730 = vsub.f32 %v669, %v726
    %v731 = vsub.f32 %v719, %v729
    %v732 = vmul.f32 %v730, 1.442695
    %v733 = vpow.pop %v732
    %v734 = vmul.f32 %v731, 1.442695
    %v735 = vpow.pop %v734
    %v736 = vsel %vm188, %v733, 0.0
    %737 = vadd.xlane.f32.xlu0 %v736
    %v738 = vpop.xlane.xlu0 %737
    %v739 = vsel %vm188, %v735, 0.0
    %740 = vadd.xlane.f32.xlu0 %v739
    %v741 = vpop.xlane.xlu0 %740
    %v742 = vrcp.pop %v738
    %v743 = vrcp.pop %v741
    %v744 = vmul.f32 %v733, %v742
    %v745 = vmul.f32 %v735, %v743
    %v746 = vpack.c.bf16 %v744, %v744
    %v747 = vpack.c.bf16 %v745, %v745
    %748 = vrot.lane.b32.xlu0 %v170, 48
    %v749 = vpop.permute.xlu0 %748
    %v751 = vsel %vm188, %v746, 0
    %v754 = vsel %vm312, %v749, 0
    %756 = vmatprep.subr.bf16.mxu0 0
    %757 = vmatpush1.bf16.msra.mxu0 %v754
    %758 = vmatprep.subr.bf16.mxu0 0
    %759 = vmatpush1.bf16.msra.mxu0 0
    %760 = vmatprep.subr.bf16.mxu0 0
    %761 = vmatpush1.bf16.msra.mxu0 0
    %762 = vmatprep.subr.bf16.mxu0 0
    %763 = vmatpush1.bf16.msra.mxu0 0
    %764 = vmatprep.subr.bf16.mxu0 0
    %765 = vmatpush1.bf16.msra.mxu0 0
    %766 = vmatprep.subr.bf16.mxu0 0
    %767 = vmatpush1.bf16.msra.mxu0 0
    %768 = vmatprep.subr.bf16.mxu0 0
    %769 = vmatpush1.bf16.msra.mxu0 0
    %770 = vmatprep.subr.bf16.mxu0 0
    %771 = vmatpush1.bf16.msra.mxu0 0
    %772 = vmatprep.subr.bf16.mxu0 0
    %773 = vmatpush1.bf16.msra.mxu0 0
    %774 = vmatprep.subr.bf16.mxu0 0
    %775 = vmatpush1.bf16.msra.mxu0 0
    %776 = vmatprep.subr.bf16.mxu0 0
    %777 = vmatpush1.bf16.msra.mxu0 0
    %778 = vmatprep.subr.bf16.mxu0 0
    %779 = vmatpush1.bf16.msra.mxu0 0
    %780 = vmatprep.subr.bf16.mxu0 0
    %781 = vmatpush1.bf16.msra.mxu0 0
    %782 = vmatprep.subr.bf16.mxu0 0
    %783 = vmatpush1.bf16.msra.mxu0 0
    %784 = vmatprep.subr.bf16.mxu0 0
    %785 = vmatpush1.bf16.msra.mxu0 0
    %786 = vmatprep.subr.bf16.mxu0 0
    %787 = vmatpush1.bf16.msra.mxu0 0
    %788 = vmatprep.mubr.bf16.mxu0 0
    %789 = vmatmul.mubr.bf16.gmra.mrb[0].mxu0 %v751
    %v790 = vpop.f32.mrb[0].mxu0
    %v791 = vadd.f32 0.0, %v790
    %v792 = vpop.f32.mrb[0].mxu0
    %v793 = vpop.f32.mrb[0].mxu0
    %v794 = vpop.f32.mrb[0].mxu0
    %795 = vdwg.mxu0
    %796 = vrot.lane.b32.xlu0 %v171, 48
    %v797 = vpop.permute.xlu0 %796
    %v799 = vsel %vm188, %v747, 0
    %v802 = vsel %vm312, %v797, 0
    %804 = vmatprep.subr.bf16.mxu0 0
    %805 = vmatpush1.bf16.msra.mxu0 %v802
    %806 = vmatprep.subr.bf16.mxu0 0
    %807 = vmatpush1.bf16.msra.mxu0 0
    %808 = vmatprep.subr.bf16.mxu0 0
    %809 = vmatpush1.bf16.msra.mxu0 0
    %810 = vmatprep.subr.bf16.mxu0 0
    %811 = vmatpush1.bf16.msra.mxu0 0
    %812 = vmatprep.subr.bf16.mxu0 0
    %813 = vmatpush1.bf16.msra.mxu0 0
    %814 = vmatprep.subr.bf16.mxu0 0
    %815 = vmatpush1.bf16.msra.mxu0 0
    %816 = vmatprep.subr.bf16.mxu0 0
    %817 = vmatpush1.bf16.msra.mxu0 0
    %818 = vmatprep.subr.bf16.mxu0 0
    %819 = vmatpush1.bf16.msra.mxu0 0
    %820 = vmatprep.subr.bf16.mxu0 0
    %821 = vmatpush1.bf16.msra.mxu0 0
    %822 = vmatprep.subr.bf16.mxu0 0
    %823 = vmatpush1.bf16.msra.mxu0 0
    %824 = vmatprep.subr.bf16.mxu0 0
    %825 = vmatpush1.bf16.msra.mxu0 0
    %826 = vmatprep.subr.bf16.mxu0 0
    %827 = vmatpush1.bf16.msra.mxu0 0
    %828 = vmatprep.subr.bf16.mxu0 0
    %829 = vmatpush1.bf16.msra.mxu0 0
    %830 = vmatprep.subr.bf16.mxu0 0
    %831 = vmatpush1.bf16.msra.mxu0 0
    %832 = vmatprep.subr.bf16.mxu0 0
    %833 = vmatpush1.bf16.msra.mxu0 0
    %834 = vmatprep.subr.bf16.mxu0 0
    %835 = vmatpush1.bf16.msra.mxu0 0
    %836 = vmatprep.mubr.bf16.mxu0 0
    %837 = vmatmul.mubr.bf16.gmra.mrb[0].mxu0 %v799
    %v838 = vpop.f32.mrb[0].mxu0
    %v839 = vadd.f32 0.0, %v838
    %v840 = vpop.f32.mrb[0].mxu0
    %v841 = vpop.f32.mrb[0].mxu0
    %v842 = vpop.f32.mrb[0].mxu0
    %843 = vdwg.mxu0
    %844 = vrot.lane.b32.xlu0 %v170, 104
    %v845 = vpop.permute.xlu0 %844
    %846 = vrot.lane.b32.xlu0 %v170, 72
    %v847 = vpop.permute.xlu0 %846
    %v849 = vsel %vm188, %v845, 0
    %v852 = vsel %vm188, %v847, 0
    %854 = vmatprep.subr.bf16.mxu0 0
    %855 = vmatpush1.bf16.xpose.msra.mxu0 %v852
    %856 = vmatprep.subr.bf16.mxu0 0
    %857 = vmatpush1.bf16.xpose.msra.mxu0 0
    %858 = vmatprep.subr.bf16.mxu0 0
    %859 = vmatpush1.bf16.xpose.msra.mxu0 0
    %860 = vmatprep.subr.bf16.mxu0 0
    %861 = vmatpush1.bf16.xpose.msra.mxu0 0
    %862 = vmatprep.subr.bf16.mxu0 0
    %863 = vmatpush1.bf16.xpose.msra.mxu0 0
    %864 = vmatprep.subr.bf16.mxu0 0
    %865 = vmatpush1.bf16.xpose.msra.mxu0 0
    %866 = vmatprep.subr.bf16.mxu0 0
    %867 = vmatpush1.bf16.xpose.msra.mxu0 0
    %868 = vmatprep.subr.bf16.mxu0 0
    %869 = vmatpush1.bf16.xpose.msra.mxu0 0
    %870 = vmatprep.subr.bf16.mxu0 0
    %871 = vmatpush1.bf16.xpose.msra.mxu0 0
    %872 = vmatprep.subr.bf16.mxu0 0
    %873 = vmatpush1.bf16.xpose.msra.mxu0 0
    %874 = vmatprep.subr.bf16.mxu0 0
    %875 = vmatpush1.bf16.xpose.msra.mxu0 0
    %876 = vmatprep.subr.bf16.mxu0 0
    %877 = vmatpush1.bf16.xpose.msra.mxu0 0
    %878 = vmatprep.subr.bf16.mxu0 0
    %879 = vmatpush1.bf16.xpose.msra.mxu0 0
    %880 = vmatprep.subr.bf16.mxu0 0
    %881 = vmatpush1.bf16.xpose.msra.mxu0 0
    %882 = vmatprep.subr.bf16.mxu0 0
    %883 = vmatpush1.bf16.xpose.msra.mxu0 0
    %884 = vmatprep.subr.bf16.mxu0 0
    %885 = vmatpush1.bf16.xpose.msra.mxu0 0
    %886 = vmatprep.mubr.bf16.mxu0 0
    %887 = vmatmul.mubr.bf16.gmra.mrb[0].mxu0 %v849
    %v888 = vpop.f32.mrb[0].mxu0
    %v889 = vadd.f32 %v179, %v888
    %v890 = vpop.f32.mrb[0].mxu0
    %v891 = vpop.f32.mrb[0].mxu0
    %v892 = vpop.f32.mrb[0].mxu0
    %893 = vdwg.mxu0
    %894 = vrot.lane.b32.xlu0 %v171, 104
    %v895 = vpop.permute.xlu0 %894
    %896 = vrot.lane.b32.xlu0 %v171, 72
    %v897 = vpop.permute.xlu0 %896
    %v899 = vsel %vm188, %v895, 0
    %v902 = vsel %vm188, %v897, 0
    %904 = vmatprep.subr.bf16.mxu0 0
    %905 = vmatpush1.bf16.xpose.msra.mxu0 %v902
    %906 = vmatprep.subr.bf16.mxu0 0
    %907 = vmatpush1.bf16.xpose.msra.mxu0 0
    %908 = vmatprep.subr.bf16.mxu0 0
    %909 = vmatpush1.bf16.xpose.msra.mxu0 0
    %910 = vmatprep.subr.bf16.mxu0 0
    %911 = vmatpush1.bf16.xpose.msra.mxu0 0
    %912 = vmatprep.subr.bf16.mxu0 0
    %913 = vmatpush1.bf16.xpose.msra.mxu0 0
    %914 = vmatprep.subr.bf16.mxu0 0
    %915 = vmatpush1.bf16.xpose.msra.mxu0 0
    %916 = vmatprep.subr.bf16.mxu0 0
    %917 = vmatpush1.bf16.xpose.msra.mxu0 0
    %918 = vmatprep.subr.bf16.mxu0 0
    %919 = vmatpush1.bf16.xpose.msra.mxu0 0
    %920 = vmatprep.subr.bf16.mxu0 0
    %921 = vmatpush1.bf16.xpose.msra.mxu0 0
    %922 = vmatprep.subr.bf16.mxu0 0
    %923 = vmatpush1.bf16.xpose.msra.mxu0 0
    %924 = vmatprep.subr.bf16.mxu0 0
    %925 = vmatpush1.bf16.xpose.msra.mxu0 0
    %926 = vmatprep.subr.bf16.mxu0 0
    %927 = vmatpush1.bf16.xpose.msra.mxu0 0
    %928 = vmatprep.subr.bf16.mxu0 0
    %929 = vmatpush1.bf16.xpose.msra.mxu0 0
    %930 = vmatprep.subr.bf16.mxu0 0
    %931 = vmatpush1.bf16.xpose.msra.mxu0 0
    %932 = vmatprep.subr.bf16.mxu0 0
    %933 = vmatpush1.bf16.xpose.msra.mxu0 0
    %934 = vmatprep.subr.bf16.mxu0 0
    %935 = vmatpush1.bf16.xpose.msra.mxu0 0
    %936 = vmatprep.mubr.bf16.mxu0 0
    %937 = vmatmul.mubr.bf16.gmra.mrb[0].mxu0 %v899
    %v938 = vpop.f32.mrb[0].mxu0
    %v939 = vadd.f32 %v183, %v938
    %v940 = vpop.f32.mrb[0].mxu0
    %v941 = vpop.f32.mrb[0].mxu0
    %v942 = vpop.f32.mrb[0].mxu0
    %943 = vdwg.mxu0
    %v944 = vsel %vm188, %v889, -inf
    %945 = vmax.xlane.f32.xlu0 %v944
    %v946 = vpop.xlane.xlu0 %945
    %v947 = vsel %vm188, %v939, -inf
    %948 = vmax.xlane.f32.xlu0 %v947
    %v949 = vpop.xlane.xlu0 %948
    %v950 = vsub.f32 %v889, %v946
    %v951 = vsub.f32 %v939, %v949
    %v952 = vmul.f32 %v950, 1.442695
    %v953 = vpow.pop %v952
    %v954 = vmul.f32 %v951, 1.442695
    %v955 = vpow.pop %v954
    %v956 = vsel %vm188, %v953, 0.0
    %957 = vadd.xlane.f32.xlu0 %v956
    %v958 = vpop.xlane.xlu0 %957
    %v959 = vsel %vm188, %v955, 0.0
    %960 = vadd.xlane.f32.xlu0 %v959
    %v961 = vpop.xlane.xlu0 %960
    %v962 = vrcp.pop %v958
    %v963 = vrcp.pop %v961
    %v964 = vmul.f32 %v953, %v962
    %v965 = vmul.f32 %v955, %v963
    %v966 = vpack.c.bf16 %v964, %v964
    %v967 = vpack.c.bf16 %v965, %v965
    %968 = vrot.lane.b32.xlu0 %v170, 40
    %v969 = vpop.permute.xlu0 %968
    %v971 = vsel %vm188, %v966, 0
    %v974 = vsel %vm312, %v969, 0
    %976 = vmatprep.subr.bf16.mxu0 0
    %977 = vmatpush1.bf16.msra.mxu0 %v974
    %978 = vmatprep.subr.bf16.mxu0 0
    %979 = vmatpush1.bf16.msra.mxu0 0
    %980 = vmatprep.subr.bf16.mxu0 0
    %981 = vmatpush1.bf16.msra.mxu0 0
    %982 = vmatprep.subr.bf16.mxu0 0
    %983 = vmatpush1.bf16.msra.mxu0 0
    %984 = vmatprep.subr.bf16.mxu0 0
    %985 = vmatpush1.bf16.msra.mxu0 0
    %986 = vmatprep.subr.bf16.mxu0 0
    %987 = vmatpush1.bf16.msra.mxu0 0
    %988 = vmatprep.subr.bf16.mxu0 0
    %989 = vmatpush1.bf16.msra.mxu0 0
    %990 = vmatprep.subr.bf16.mxu0 0
    %991 = vmatpush1.bf16.msra.mxu0 0
    %992 = vmatprep.subr.bf16.mxu0 0
    %993 = vmatpush1.bf16.msra.mxu0 0
    %994 = vmatprep.subr.bf16.mxu0 0
    %995 = vmatpush1.bf16.msra.mxu0 0
    %996 = vmatprep.subr.bf16.mxu0 0
    %997 = vmatpush1.bf16.msra.mxu0 0
    %998 = vmatprep.subr.bf16.mxu0 0
    %999 = vmatpush1.bf16.msra.mxu0 0
    %1000 = vmatprep.subr.bf16.mxu0 0
    %1001 = vmatpush1.bf16.msra.mxu0 0
    %1002 = vmatprep.subr.bf16.mxu0 0
    %1003 = vmatpush1.bf16.msra.mxu0 0
    %1004 = vmatprep.subr.bf16.mxu0 0
    %1005 = vmatpush1.bf16.msra.mxu0 0
    %1006 = vmatprep.subr.bf16.mxu0 0
    %1007 = vmatpush1.bf16.msra.mxu0 0
    %1008 = vmatprep.mubr.bf16.mxu0 0
    %1009 = vmatmul.mubr.bf16.gmra.mrb[0].mxu0 %v971
    %v1010 = vpop.f32.mrb[0].mxu0
    %v1011 = vadd.f32 0.0, %v1010
    %v1012 = vpop.f32.mrb[0].mxu0
    %v1013 = vpop.f32.mrb[0].mxu0
    %v1014 = vpop.f32.mrb[0].mxu0
    %1015 = vdwg.mxu0
    %1016 = vrot.lane.b32.xlu0 %v171, 40
    %v1017 = vpop.permute.xlu0 %1016
    %v1019 = vsel %vm188, %v967, 0
    %v1022 = vsel %vm312, %v1017, 0
    %1024 = vmatprep.subr.bf16.mxu0 0
    %1025 = vmatpush1.bf16.msra.mxu0 %v1022
    %1026 = vmatprep.subr.bf16.mxu0 0
    %1027 = vmatpush1.bf16.msra.mxu0 0
    %1028 = vmatprep.subr.bf16.mxu0 0
    %1029 = vmatpush1.bf16.msra.mxu0 0
    %1030 = vmatprep.subr.bf16.mxu0 0
    %1031 = vmatpush1.bf16.msra.mxu0 0
    %1032 = vmatprep.subr.bf16.mxu0 0
    %1033 = vmatpush1.bf16.msra.mxu0 0
    %1034 = vmatprep.subr.bf16.mxu0 0
    %1035 = vmatpush1.bf16.msra.mxu0 0
    %1036 = vmatprep.subr.bf16.mxu0 0
    %1037 = vmatpush1.bf16.msra.mxu0 0
    %1038 = vmatprep.subr.bf16.mxu0 0
    %1039 = vmatpush1.bf16.msra.mxu0 0
    %1040 = vmatprep.subr.bf16.mxu0 0
    %1041 = vmatpush1.bf16.msra.mxu0 0
    %1042 = vmatprep.subr.bf16.mxu0 0
    %1043 = vmatpush1.bf16.msra.mxu0 0
    %1044 = vmatprep.subr.bf16.mxu0 0
    %1045 = vmatpush1.bf16.msra.mxu0 0
    %1046 = vmatprep.subr.bf16.mxu0 0
    %1047 = vmatpush1.bf16.msra.mxu0 0
    %1048 = vmatprep.subr.bf16.mxu0 0
    %1049 = vmatpush1.bf16.msra.mxu0 0
    %1050 = vmatprep.subr.bf16.mxu0 0
    %1051 = vmatpush1.bf16.msra.mxu0 0
    %1052 = vmatprep.subr.bf16.mxu0 0
    %1053 = vmatpush1.bf16.msra.mxu0 0
    %1054 = vmatprep.subr.bf16.mxu0 0
    %1055 = vmatpush1.bf16.msra.mxu0 0
    %1056 = vmatprep.mubr.bf16.mxu0 0
    %1057 = vmatmul.mubr.bf16.gmra.mrb[0].mxu0 %v1019
    %v1058 = vpop.f32.mrb[0].mxu0
    %v1059 = vadd.f32 0.0, %v1058
    %v1060 = vpop.f32.mrb[0].mxu0
    %v1061 = vpop.f32.mrb[0].mxu0
    %v1062 = vpop.f32.mrb[0].mxu0
    %1063 = vdwg.mxu0
    %1066 = vrot.lane.b32.xlu0 %v571, 8
    %v1067 = vpop.permute.xlu0 %1066
    %1068 = vrot.lane.b32.xlu0 %v619, 8
    %v1069 = vpop.permute.xlu0 %1068
    %1074 = vrot.lane.b32.xlu0 %v791, 16
    %v1075 = vpop.permute.xlu0 %1074
    %1076 = vrot.lane.b32.xlu0 %v839, 16
    %v1077 = vpop.permute.xlu0 %1076
    %1082 = vrot.lane.b32.xlu0 %v1011, 24
    %v1083 = vpop.permute.xlu0 %1082
    %1084 = vrot.lane.b32.xlu0 %v1059, 24
    %v1085 = vpop.permute.xlu0 %1084
    %v1088 = vsel %vm188, %v351, %v1067
    %v1089 = vsel %vm188, %v399, %v1069
    %vm1090 = vcmask 130048
    %v1091 = vsel %vm1090, %v1088, %v1075
    %v1092 = vsel %vm1090, %v1089, %v1077
    %vm1093 = vcmask 195584
    %v1094 = vsel %vm1093, %v1091, %v1083
    %v1095 = vsel %vm1093, %v1092, %v1085
    %v1096 = vpack.c.bf16 %v1095, %v1094
    %v1097 = vld [vmem:[%s3] sm:$0xf]
    %v1098 = vld [vmem:[%s3 + $0x4] sm:$0xf]
    %v1099 = vld [vmem:[%s3 + $0x8] sm:$0xf]
    %v1100 = vld [vmem:[%s3 + $0xc] sm:$0xf]
    %v1105 = vunpack.c.l.b16 %v1097
    %v1106 = vunpack.c.l.b16 %v1098
    %v1107 = vunpack.c.l.b16 %v1099
    %v1108 = vunpack.c.l.b16 %v1100
    %v1109 = vpack.c.b16 %v1106, %v1105
    %v1110 = vpack.c.b16 %v1108, %v1107
    %v1114 = vsel %vm61, %v1096, 0
    %1116 = vmatprep.subr.bf16.mxu0 0
    %1117 = vmatpush1.bf16.msra.mxu0 %v1109
    %1118 = vmatprep.subr.bf16.mxu0 0
    %1119 = vmatpush1.bf16.msra.mxu0 %v1110
    %1120 = vmatprep.subr.bf16.mxu0 0
    %1121 = vmatpush1.bf16.msra.mxu0 0
    %1122 = vmatprep.subr.bf16.mxu0 0
    %1123 = vmatpush1.bf16.msra.mxu0 0
    %1124 = vmatprep.subr.bf16.mxu0 0
    %1125 = vmatpush1.bf16.msra.mxu0 0
    %1126 = vmatprep.subr.bf16.mxu0 0
    %1127 = vmatpush1.bf16.msra.mxu0 0
    %1128 = vmatprep.subr.bf16.mxu0 0
    %1129 = vmatpush1.bf16.msra.mxu0 0
    %1130 = vmatprep.subr.bf16.mxu0 0
    %1131 = vmatpush1.bf16.msra.mxu0 0
    %1132 = vmatprep.subr.bf16.mxu0 0
    %1133 = vmatpush1.bf16.msra.mxu0 0
    %1134 = vmatprep.subr.bf16.mxu0 0
    %1135 = vmatpush1.bf16.msra.mxu0 0
    %1136 = vmatprep.subr.bf16.mxu0 0
    %1137 = vmatpush1.bf16.msra.mxu0 0
    %1138 = vmatprep.subr.bf16.mxu0 0
    %1139 = vmatpush1.bf16.msra.mxu0 0
    %1140 = vmatprep.subr.bf16.mxu0 0
    %1141 = vmatpush1.bf16.msra.mxu0 0
    %1142 = vmatprep.subr.bf16.mxu0 0
    %1143 = vmatpush1.bf16.msra.mxu0 0
    %1144 = vmatprep.subr.bf16.mxu0 0
    %1145 = vmatpush1.bf16.msra.mxu0 0
    %1146 = vmatprep.subr.bf16.mxu0 0
    %1147 = vmatpush1.bf16.msra.mxu0 0
    %1148 = vmatprep.mubr.bf16.mxu0 0
    %1149 = vmatmul.mubr.bf16.gmra.mrb[0].mxu0 %v1114
    %v1150 = vpop.f32.mrb[0].mxu0
    %v1151 = vadd.f32 0.0, %v1150
    %v1152 = vpop.f32.mrb[0].mxu0
    %v1153 = vpop.f32.mrb[0].mxu0
    %v1154 = vadd.f32 0.0, %v1153
    %v1155 = vpop.f32.mrb[0].mxu0
    %1156 = vdwg.mxu0
    %v1157 = vadd.f32 %v57, %v1151
    %v1158 = vadd.f32 %v58, %v1154
    %v1159 = vld [vmem:[%s6] sm:$0x1]
    %v1160 = vld [vmem:[%s7] sm:$0x1]
    %v1161 = vsel %vm61, %v1157, 0.0
    %1162 = vadd.xlane.f32.xlu0 %v1161
    %v1163 = vpop.xlane.xlu0 %1162
    %v1164 = vsel %vm61, %v1158, 0.0
    %1165 = vadd.xlane.f32.xlu0 %v1164
    %v1166 = vpop.xlane.xlu0 %1165
    %v1167 = vmul.f32 %v1163, %v68
    %v1168 = vmul.f32 %v1166, %v68
    %v1169 = vsub.f32 %v1157, %v1167
    %v1170 = vsub.f32 %v1158, %v1168
    %v1171 = vmul.f32 %v1169, %v1169
    %v1172 = vmul.f32 %v1170, %v1170
    %v1173 = vsel %vm61, %v1171, 0.0
    %1174 = vadd.xlane.f32.xlu0 %v1173
    %v1175 = vpop.xlane.xlu0 %1174
    %v1176 = vsel %vm61, %v1172, 0.0
    %1177 = vadd.xlane.f32.xlu0 %v1176
    %v1178 = vpop.xlane.xlu0 %1177
    %v1179 = vmul.f32 %v1175, %v68
    %v1180 = vmul.f32 %v1178, %v68
    %v1181 = vadd.f32 %v1179, 1e-05
    %v1182 = vadd.f32 %v1180, 1e-05
    %v1183 = vrsqrt.pop %v1181
    %v1184 = vrsqrt.pop %v1182
    %v1185 = vmul.f32 %v1169, %v1183
    %v1186 = vmul.f32 %v1170, %v1184
    %v1188 = vlaneseq
    %v1189 = vshrl.u32 %v1188, 7
    %v1190 = vsub.s32 0, %v1189
    %v1191 = vrot.slane %v1159, %v1190
    %v1193 = vmul.f32 %v1185, %v1191
    %v1194 = vmul.f32 %v1186, %v1191
    %v1196 = vlaneseq
    %v1197 = vshrl.u32 %v1196, 7
    %v1198 = vsub.s32 0, %v1197
    %v1199 = vrot.slane %v1160, %v1198
    %v1201 = vadd.f32 %v1193, %v1199
    %v1202 = vadd.f32 %v1194, %v1199
    %v1203 = vpack.c.bf16 %v1202, %v1201
    %v1204 = vld [vmem:[#allocation2] sm:$0xf]
    %v1205 = vld [vmem:[#allocation2 + $0x4] sm:$0xf]
    %v1206 = vld [vmem:[#allocation2 + $0x8] sm:$0xf]
    %v1207 = vld [vmem:[#allocation2 + $0xc] sm:$0xf]
    %v1208 = vld [vmem:[%s9] sm:$0x1]
    %v1210 = vlaneseq
    %v1211 = vshrl.u32 %v1210, 7
    %v1212 = vsub.s32 0, %v1211
    %v1213 = vrot.slane %v1208, %v1212
    %v1219 = vunpack.c.l.b16 %v1204
    %v1220 = vunpack.c.l.b16 %v1205
    %v1221 = vunpack.c.l.b16 %v1206
    %v1222 = vunpack.c.l.b16 %v1207
    %v1223 = vpack.c.b16 %v1220, %v1219
    %v1224 = vpack.c.b16 %v1222, %v1221
    %v1228 = vsel %vm61, %v1203, 0
    %1230 = vmatprep.subr.bf16.mxu0 0
    %1231 = vmatpush1.bf16.msra.mxu0 %v1223
    %1232 = vmatprep.subr.bf16.mxu0 0
    %1233 = vmatpush1.bf16.msra.mxu0 %v1224
    %1234 = vmatprep.subr.bf16.mxu0 0
    %1235 = vmatpush1.bf16.msra.mxu0 0
    %1236 = vmatprep.subr.bf16.mxu0 0
    %1237 = vmatpush1.bf16.msra.mxu0 0
    %1238 = vmatprep.subr.bf16.mxu0 0
    %1239 = vmatpush1.bf16.msra.mxu0 0
    %1240 = vmatprep.subr.bf16.mxu0 0
    %1241 = vmatpush1.bf16.msra.mxu0 0
    %1242 = vmatprep.subr.bf16.mxu0 0
    %1243 = vmatpush1.bf16.msra.mxu0 0
    %1244 = vmatprep.subr.bf16.mxu0 0
    %1245 = vmatpush1.bf16.msra.mxu0 0
    %1246 = vmatprep.subr.bf16.mxu0 0
    %1247 = vmatpush1.bf16.msra.mxu0 0
    %1248 = vmatprep.subr.bf16.mxu0 0
    %1249 = vmatpush1.bf16.msra.mxu0 0
    %1250 = vmatprep.subr.bf16.mxu0 0
    %1251 = vmatpush1.bf16.msra.mxu0 0
    %1252 = vmatprep.subr.bf16.mxu0 0
    %1253 = vmatpush1.bf16.msra.mxu0 0
    %1254 = vmatprep.subr.bf16.mxu0 0
    %1255 = vmatpush1.bf16.msra.mxu0 0
    %1256 = vmatprep.subr.bf16.mxu0 0
    %1257 = vmatpush1.bf16.msra.mxu0 0
    %1258 = vmatprep.subr.bf16.mxu0 0
    %1259 = vmatpush1.bf16.msra.mxu0 0
    %1260 = vmatprep.subr.bf16.mxu0 0
    %1261 = vmatpush1.bf16.msra.mxu0 0
    %1262 = vmatprep.mubr.bf16.mxu0 0
    %1263 = vmatmul.mubr.bf16.gmra.mrb[0].mxu0 %v1228
    %v1264 = vpop.f32.mrb[0].mxu0
    %v1265 = vadd.f32 %v1213, %v1264
    %v1266 = vpop.f32.mrb[0].mxu0
    %v1267 = vpop.f32.mrb[0].mxu0
    %v1268 = vadd.f32 %v1213, %v1267
    %v1269 = vpop.f32.mrb[0].mxu0
    %1270 = vdwg.mxu0
    %v1271 = vmax.f32 %v1265, 0.0
    %v1272 = vmax.f32 %v1268, 0.0
    %v1273 = vpack.c.bf16 %v1272, %v1271
    %v1274 = vld [vmem:[%s10] sm:$0xf]
    %v1275 = vld [vmem:[%s10 + $0x4] sm:$0xf]
    %v1276 = vld [vmem:[%s10 + $0x8] sm:$0xf]
    %v1277 = vld [vmem:[%s10 + $0xc] sm:$0xf]
    %v1278 = vld [vmem:[%s10 + $0x10] sm:$0xf]
    %v1279 = vld [vmem:[%s10 + $0x14] sm:$0xf]
    %v1280 = vld [vmem:[%s10 + $0x18] sm:$0xf]
    %v1281 = vld [vmem:[%s10 + $0x1c] sm:$0xf]
    %v1282 = vld [vmem:[%s11] sm:$0x1]
    %v1284 = vlaneseq
    %v1285 = vshrl.u32 %v1284, 7
    %v1286 = vsub.s32 0, %v1285
    %v1287 = vrot.slane %v1282, %v1286
    %v1297 = vunpack.c.l.b16 %v1274
    %v1298 = vunpack.c.l.b16 %v1275
    %v1299 = vunpack.c.l.b16 %v1276
    %v1300 = vunpack.c.l.b16 %v1277
    %v1301 = vunpack.c.l.b16 %v1278
    %v1302 = vunpack.c.l.b16 %v1279
    %v1303 = vunpack.c.l.b16 %v1280
    %v1304 = vunpack.c.l.b16 %v1281
    %v1305 = vpack.c.b16 %v1298, %v1297
    %v1306 = vpack.c.b16 %v1300, %v1299
    %v1307 = vpack.c.b16 %v1302, %v1301
    %v1308 = vpack.c.b16 %v1304, %v1303
    %vm1313 = vcmask 523264
    %v1315 = vsel %vm1313, %v1273, 0
    %1317 = vmatprep.subr.bf16.mxu0 0
    %1318 = vmatpush1.bf16.msra.mxu0 %v1305
    %1319 = vmatprep.subr.bf16.mxu0 0
    %1320 = vmatpush1.bf16.msra.mxu0 %v1306
    %1321 = vmatprep.subr.bf16.mxu0 0
    %1322 = vmatpush1.bf16.msra.mxu0 %v1307
    %1323 = vmatprep.subr.bf16.mxu0 0
    %1324 = vmatpush1.bf16.msra.mxu0 %v1308
    %1325 = vmatprep.subr.bf16.mxu0 0
    %1326 = vmatpush1.bf16.msra.mxu0 0
    %1327 = vmatprep.subr.bf16.mxu0 0
    %1328 = vmatpush1.bf16.msra.mxu0 0
    %1329 = vmatprep.subr.bf16.mxu0 0
    %1330 = vmatpush1.bf16.msra.mxu0 0
    %1331 = vmatprep.subr.bf16.mxu0 0
    %1332 = vmatpush1.bf16.msra.mxu0 0
    %1333 = vmatprep.subr.bf16.mxu0 0
    %1334 = vmatpush1.bf16.msra.mxu0 0
    %1335 = vmatprep.subr.bf16.mxu0 0
    %1336 = vmatpush1.bf16.msra.mxu0 0
    %1337 = vmatprep.subr.bf16.mxu0 0
    %1338 = vmatpush1.bf16.msra.mxu0 0
    %1339 = vmatprep.subr.bf16.mxu0 0
    %1340 = vmatpush1.bf16.msra.mxu0 0
    %1341 = vmatprep.subr.bf16.mxu0 0
    %1342 = vmatpush1.bf16.msra.mxu0 0
    %1343 = vmatprep.subr.bf16.mxu0 0
    %1344 = vmatpush1.bf16.msra.mxu0 0
    %1345 = vmatprep.subr.bf16.mxu0 0
    %1346 = vmatpush1.bf16.msra.mxu0 0
    %1347 = vmatprep.subr.bf16.mxu0 0
    %1348 = vmatpush1.bf16.msra.mxu0 0
    %1349 = vmatprep.mubr.bf16.mxu0 0
    %1350 = vmatmul.mubr.bf16.gmra.mrb[0].mxu0 %v1315
    %v1351 = vpop.f32.mrb[0].mxu0
    %v1352 = vadd.f32 %v1287, %v1351
    %v1353 = vpop.f32.mrb[0].mxu0
    %v1354 = vpop.f32.mrb[0].mxu0
    %v1355 = vadd.f32 %v1287, %v1354
    %v1356 = vpop.f32.mrb[0].mxu0
    %1357 = vdwg.mxu0
    %v1358 = vadd.f32 %v1157, %v1352
    %v1359 = vadd.f32 %v1158, %v1355
    %1360 = vst.msk [vmem:[#allocation5] sm:$0xff] %vm61, %v1358
    %1361 = vst.msk [vmem:[#allocation5 + $0x8] sm:$0xff] %vm61, %v1359
    // Predicated region
    $region54: #{tpu_custom_call.1} parent=1 // pred_check
      _
    $region55: #{tpu_custom_call.1} parent=1 // pred_check_branch
      %1363 = sbr.rel (0) target = $region57
    $region56: #{tpu_custom_call.1} parent=1 // pred_region
      %s1365 = ssub.s32 256, 256
      %1366 = vsyncadd [#allocation4], %s1365
      %s1367 = sshll.u32 [#allocation5], 4
      %s1368 = int_to_ptr.vmem [resolvable:$true] %s1367
      %1373 = dma.vmem_to_hbm [thread:$0]  %s1368, 256, %s12, [#allocation4], 128, 128, 8
    $region57: #{tpu_custom_call.1} parent=1 // pred_fallthru
      _
    // Predicated region
    $region58: #{tpu_custom_call.1} parent=1 // pred_check
      _
    $region59: #{tpu_custom_call.1} parent=1 // pred_check_branch
      %1375 = sbr.rel (0) target = $region61
    $region60: #{tpu_custom_call.1} parent=1 // pred_region
      %1376 = dma.done [#allocation4], 256
    $region61: #{tpu_custom_call.1} parent=1 // pred_fallthru
      _
    %1377 = vsyncpa [#allocation3], 1
    %1378 = vsyncpa [#allocation4], 1

</llo_original>
